<compile_context>
chip_gen: v5e
topology: v5e:2x2
jax: 0.10.0
libtpu: 0.0.40
codegen_flags: <defaults>
</compile_context>

<pallas_src>
import functools

import jax
import jax.numpy as jnp
from jax.experimental import pallas as pl
from jax.experimental.pallas import tpu as pltpu


def _pwconvff_kernel(x_ref, film_ref, w_ref, avg_ref, p_ref, o_ref,
                     *, seq_len, block_g, gh):
    """One grid step: `block_g` group-batches (each = G lane-packed sequences).

    x_ref   : (R, GH)            f32   R = block_g * seq_len, GH = G * H
    film_ref: (block_g, 2, GH)   f32   [:, 0, :] = gammas, [:, 1, :] = betas
    w_ref   : (2, 3*GH, GH)      bf16  tap-fused block-diag conv weights
    avg_ref : (GH, GH)           bf16  block-diag ones/H (LayerNorm stats)
    p_ref   : (4, GH)            f32   rows = [conv1.b, conv2.b, ln.w, ln.b]
    o_ref   : (R, GH)            f32
    """
    R = block_g * seq_len
    x = x_ref[...]                                           # (R, GH) f32

    # Sequence-boundary masks on the flattened row axis (modular arithmetic).
    row = jax.lax.broadcasted_iota(jnp.int32, (R, 1), 0)
    t = row % seq_len
    is_first = t == 0
    is_last = t == seq_len - 1

    def conv3(inp, idx):
        # torch Conv1d(k=3, pad=1) in row layout, fused over the 3 taps:
        #   y[t] = [x[t-1] | x[t] | x[t+1]] @ [W0 ; W1 ; W2]
        # Shifted inputs via pltpu.roll (XLU slot) + boundary masks, so there
        # is no conv leakage across sequences packed into the same row block.
        prev = jnp.where(is_first, 0.0, pltpu.roll(inp, shift=1, axis=0))
        nxt = jnp.where(is_last, 0.0, pltpu.roll(inp, shift=R - 1, axis=0))
        taps = jnp.concatenate([prev, inp, nxt], axis=1).astype(jnp.bfloat16)
        return jnp.dot(taps, w_ref[idx], preferred_element_type=jnp.float32)

    # Conv1d(3) -> ReLU -> Conv1d(3); Dropout(0.1) = identity (eval mode).
    y1 = jnp.maximum(conv3(x, 0) + p_ref[0:1, :], 0.0)
    y2 = conv3(y1, 1) + p_ref[1:2, :]

    # Residual + per-lane-group LayerNorm.  Group mean/var via a block-diag
    # averaging matmul (bf16 operands, f32 accumulation); epilogue stays f32.
    r = y2 + x
    avg = avg_ref[...]
    mean = jnp.dot(r.astype(jnp.bfloat16), avg,
                   preferred_element_type=jnp.float32)
    cent = r - mean
    var = jnp.dot((cent * cent).astype(jnp.bfloat16), avg,
                  preferred_element_type=jnp.float32)
    y = cent * jax.lax.rsqrt(var + 1e-5)
    y = y * p_ref[2:3, :] + p_ref[3:4, :]

    # FiLM conditioning per lane group, emitted as ONE full-tile dense store.
    y3 = y.reshape(block_g, seq_len, gh)
    out = film_ref[:, 0:1, :] * y3 + film_ref[:, 1:2, :]
    o_ref[...] = out.reshape(R, gh)


def _pick_block_groups(num_gb, seq_len, target_rows):
    """Largest divisor `g` of num_gb whose row tile g*seq_len fits target_rows,
    keeping >= 2 grid steps whenever possible (both v7x TensorCores busy)."""
    limit = max(target_rows, seq_len)
    best = 1
    for cand in range(1, num_gb + 1):
        if num_gb % cand != 0:
            continue
        if cand * seq_len > limit:
            continue
        if num_gb >= 2 and num_gb // cand < 2:
            continue                     # keep the parallel grid length >= 2
        best = cand
    return best


@functools.partial(jax.jit, static_argnames=("target_rows",))
def position_wise_conv_ff(x, film_params, w1, b1, w2, b2, ln_w, ln_b,
                          *, target_rows=1024):
    """Forward pass of PositionWiseConvFF (eval mode).

    x           : (B, L, H) f32
    film_params : (B, 2H) f32, or None (module then skips FiLM)
    w1, w2      : (H, H, 3) torch Conv1d weight layout (out, in, k)
    b1, b2      : (H,)   conv biases
    ln_w, ln_b  : (H,)   LayerNorm affine params
    """
    B, L, H = x.shape
    if film_params is None:
        film_params = jnp.concatenate(
            [jnp.ones((B, H), jnp.float32), jnp.zeros((B, H), jnp.float32)],
            axis=-1)

    # Lane-packing factor: G sequences share one 128-lane row (G*H lanes).
    G = 128 // H if (H <= 128 and 128 % H == 0) else 1
    GH = G * H
    Bp = ((B + G - 1) // G) * G
    num_gb = Bp // G

    xf = x.astype(jnp.float32)
    ff = film_params.astype(jnp.float32)
    if Bp != B:                                   # zero-pad batch to G-multiple
        xf = jnp.concatenate(
            [xf, jnp.zeros((Bp - B, L, H), jnp.float32)], axis=0)
        ff = jnp.concatenate(
            [ff, jnp.zeros((Bp - B, 2 * H), jnp.float32)], axis=0)

    # Pack G sequences per row: row (gb, t), lanes [g*H:(g+1)*H] = batch gb*G+g.
    x2d = xf.reshape(num_gb, G, L, H).transpose(0, 2, 1, 3).reshape(num_gb * L, GH)
    film3 = ff.reshape(num_gb, G, 2, H).transpose(0, 2, 1, 3).reshape(num_gb, 2, GH)

    # Tap-fused, block-diagonal conv weights: (2, 3*GH, GH) bf16,
    # row order [prev ; cur ; next] matching the in-kernel tap concat.
    eye_g = jnp.eye(G, dtype=jnp.float32)

    def pack_w(w):                       # torch Conv1d weight (out, in, 3)
        return jnp.concatenate(
            [jnp.kron(eye_g, w[:, :, k].T) for k in range(3)], axis=0)

    w_all = jnp.stack([pack_w(w1), pack_w(w2)]).astype(jnp.bfloat16)
    # Block-diag averaging matrix for per-group LayerNorm stats.
    avg = jnp.kron(eye_g, jnp.full((H, H), 1.0 / H, jnp.float32)).astype(jnp.bfloat16)
    # Biases + LayerNorm affine params, lane-tiled per group: (4, GH) f32.
    params = jnp.stack([jnp.tile(b1, G), jnp.tile(b2, G),
                        jnp.tile(ln_w, G), jnp.tile(ln_b, G)]).astype(jnp.float32)

    if L % 8 == 0:
        block_g = _pick_block_groups(num_gb, L, target_rows)
    else:
        block_g = num_gb     # full-extent row block is always a legal shape
    rows = block_g * L

    grid_spec = pltpu.PrefetchScalarGridSpec(
        num_scalar_prefetch=0,
        grid=(num_gb // block_g,),
        in_specs=[
            pl.BlockSpec((rows, GH), lambda i: (i, 0)),            # x rows
            pl.BlockSpec((block_g, 2, GH), lambda i: (i, 0, 0)),   # FiLM
            pl.BlockSpec((2, 3 * GH, GH), lambda i: (0, 0, 0)),    # conv weights
            pl.BlockSpec((GH, GH), lambda i: (0, 0)),              # LN averaging
            pl.BlockSpec((4, GH), lambda i: (0, 0)),               # biases + LN affine
        ],
        out_specs=pl.BlockSpec((rows, GH), lambda i: (i, 0)),
    )

    out2d = pl.pallas_call(
        functools.partial(_pwconvff_kernel, seq_len=L, block_g=block_g, gh=GH),
        out_shape=jax.ShapeDtypeStruct((num_gb * L, GH), jnp.float32),
        grid_spec=grid_spec,
        compiler_params=pltpu.CompilerParams(
            dimension_semantics=("parallel",),
            vmem_limit_bytes=32 * 1024 * 1024),
    )(x2d, film3, w_all, avg, params)

    out = (out2d.reshape(num_gb, L, G, H).transpose(0, 2, 1, 3)
           .reshape(Bp, L, H))
    return out[:B]


def _xavier_uniform(key, shape, gain):
    # torch Conv1d weight shape (out, in, k): fan_in = in*k, fan_out = out*k
    out_c, in_c, k = shape
    fan_in, fan_out = in_c * k, out_c * k
    bound = gain * jnp.sqrt(6.0 / (fan_in + fan_out))
    return jax.random.uniform(key, shape, jnp.float32, -bound, bound)


def _reference_f32(x, film, w1, b1, w2, b2, ln_w, ln_b):
    """Pure-f32 JAX reference mirroring the PyTorch forward (eval mode)."""
    def conv1d(v, w, b):  # v (B, L, H), w (H_out, H_in, 3)
        vt = jnp.transpose(v, (0, 2, 1))
        y = jax.lax.conv_general_dilated(
            vt, w, window_strides=(1,), padding=((1, 1),),
            dimension_numbers=("NCH", "OIH", "NCH"))
        return jnp.transpose(y + b[None, :, None], (0, 2, 1))
    h = jax.nn.relu(conv1d(x, w1, b1))
    y2 = conv1d(h, w2, b2)
    r = y2 + x
    mu = r.mean(-1, keepdims=True)
    var = ((r - mu) ** 2).mean(-1, keepdims=True)
    y = (r - mu) / jnp.sqrt(var + 1e-5) * ln_w + ln_b
    H = x.shape[-1]
    return film[:, None, :H] * y + film[:, None, H:]


def _reference_mixed(x, film, w1, b1, w2, b2, ln_w, ln_b):
    """Reference with the kernel's precision policy: bf16 MXU operands with
    fused k=3 taps, f32 accumulation, bf16-stat LayerNorm, f32 epilogue."""
    H = x.shape[-1]

    def conv3(v, w, b):
        wt = jnp.concatenate([w[:, :, k].T for k in range(3)],
                             axis=0).astype(jnp.bfloat16)        # (3H, H)
        vb = v.astype(jnp.bfloat16)
        zero = jnp.zeros_like(vb[:, :1])
        prev = jnp.concatenate([zero, vb[:, :-1]], axis=1)
        nxt = jnp.concatenate([vb[:, 1:], zero], axis=1)
        taps = jnp.concatenate([prev, vb, nxt], axis=-1)         # (B, L, 3H)
        y = jnp.einsum("blk,kh->blh", taps, wt,
                       preferred_element_type=jnp.float32)
        return y + b

    y1 = jax.nn.relu(conv3(x, w1, b1))
    y2 = conv3(y1, w2, b2)
    r = y2 + x
    avg = jnp.full((H, H), 1.0 / H, jnp.float32).astype(jnp.bfloat16)
    mean = jnp.einsum("blh,hk->blk", r.astype(jnp.bfloat16), avg,
                      preferred_element_type=jnp.float32)
    cent = r - mean
    var = jnp.einsum("blh,hk->blk", (cent * cent).astype(jnp.bfloat16), avg,
                     preferred_element_type=jnp.float32)
    y = cent * jax.lax.rsqrt(var + 1e-5) * ln_w + ln_b
    return film[:, None, :H] * y + film[:, None, H:]


if __name__ == "__main__":
    B, L, H = 16, 64, 32
    key = jax.random.PRNGKey(0)
    kx, kf, k1, k2, kb1, kb2 = jax.random.split(key, 6)

    x = jax.random.normal(kx, (B, L, H), jnp.float32)
    film_params = jax.random.normal(kf, (B, 2 * H), jnp.float32)

    # Conv weights: xavier_uniform with gain=relu (sqrt 2) then linear (1.0).
    w1 = _xavier_uniform(k1, (H, H, 3), gain=jnp.sqrt(2.0))
    w2 = _xavier_uniform(k2, (H, H, 3), gain=1.0)
    # Conv biases: torch default uniform(-1/sqrt(fan_in), +).
    bnd = 1.0 / jnp.sqrt(jnp.float32(H * 3))
    b1 = jax.random.uniform(kb1, (H,), jnp.float32, -bnd, bnd)
    b2 = jax.random.uniform(kb2, (H,), jnp.float32, -bnd, bnd)
    # LayerNorm affine params: default ones / zeros.
    ln_w = jnp.ones((H,), jnp.float32)
    ln_b = jnp.zeros((H,), jnp.float32)

    out = position_wise_conv_ff(x, film_params, w1, b1, w2, b2, ln_w, ln_b)
    out = jax.block_until_ready(out)
    assert out.shape == (B, L, H)
    assert bool(jnp.all(jnp.isfinite(out)))

    # Check against a reference using the same mixed-precision policy.
    # Tolerance covers f32 accumulation-order differences (fused K vs XLA
    # einsum) amplified by the bf16 re-rounding of intermediates.
    ref_mixed = _reference_mixed(x, film_params, w1, b1, w2, b2, ln_w, ln_b)
    err_mixed = float(jnp.max(jnp.abs(out - ref_mixed)))
    assert jnp.allclose(out, ref_mixed, atol=2e-2, rtol=2e-2), (
        f"kernel does not match mixed-precision reference (max err {err_mixed})")

    # Sanity check against pure-f32 torch semantics (bf16 MXU operands and
    # bf16 LayerNorm stats keep the deviation small).
    ref_f32 = _reference_f32(x, film_params, w1, b1, w2, b2, ln_w, ln_b)
    max_err = float(jnp.max(jnp.abs(out - ref_f32)))
    assert max_err < 0.25, f"deviation from f32 reference too large: {max_err}"

    print("KERNEL_OK")
</pallas_src>

<mosaic_0001>
module attributes {stable_mosaic.version = 11 : i64} {
  func.func @_pwconvff_kernel(%arg0: i32, %arg1: memref<128x128xf32, #tpu.memory_space<vmem>>, %arg2: memref<2x2x128xf32, #tpu.memory_space<vmem>>, %arg3: memref<2x384x128xbf16, #tpu.memory_space<vmem>>, %arg4: memref<128x128xbf16, #tpu.memory_space<vmem>>, %arg5: memref<4x128xf32, #tpu.memory_space<vmem>>, %arg6: memref<128x128xf32, #tpu.memory_space<vmem>>) attributes {dimension_semantics = [#tpu.dimension_semantics<parallel>], iteration_bounds = array<i64: 2>, scalar_prefetch = 0 : i64, scratch_operands = 0 : i64, tpu.core_type = #tpu.core_type<tc>, window_params = [{transform_indices = @transform_0, window_bounds = array<i64: 128, 128>}, {transform_indices = @transform_1, window_bounds = array<i64: 2, 2, 128>}, {pipeline_mode = #tpu.pipeline_mode<synchronous>, transform_indices = @transform_2, window_bounds = array<i64: 2, 384, 128>}, {pipeline_mode = #tpu.pipeline_mode<synchronous>, transform_indices = @transform_3, window_bounds = array<i64: 128, 128>}, {pipeline_mode = #tpu.pipeline_mode<synchronous>, transform_indices = @transform_4, window_bounds = array<i64: 4, 128>}, {transform_indices = @transform_5, window_bounds = array<i64: 128, 128>}]} {
    %c0 = arith.constant 0 : index
    %c0_0 = arith.constant 0 : index
    %0 = vector.load %arg1[%c0, %c0_0] : memref<128x128xf32, #tpu.memory_space<vmem>>, vector<128x128xf32>
    %1 = tpu.iota {dimensions = array<i32: 0>} : vector<128x1xi32>
    %c64_i32 = arith.constant 64 : i32
    %c0_i32 = arith.constant 0 : i32
    %2 = arith.cmpi eq, %c64_i32, %c0_i32 : i32
    %c1_i32 = arith.constant 1 : i32
    %3 = arith.select %2, %c1_i32, %c64_i32 : i32
    %4 = vector.broadcast %3 : i32 to vector<128x1xi32>
    %5 = arith.remsi %1, %4 : vector<128x1xi32>
    %c0_i32_1 = arith.constant 0 : i32
    %6 = vector.broadcast %c0_i32_1 : i32 to vector<128x1xi32>
    %7 = arith.cmpi ne, %5, %6 : vector<128x1xi32>
    %c0_i32_2 = arith.constant 0 : i32
    %8 = vector.broadcast %c0_i32_2 : i32 to vector<128x1xi32>
    %9 = arith.cmpi slt, %5, %8 : vector<128x1xi32>
    %c0_i32_3 = arith.constant 0 : i32
    %10 = arith.cmpi slt, %3, %c0_i32_3 : i32
    %11 = vector.broadcast %10 : i1 to vector<128x1xi1>
    %12 = vector.broadcast %11 : vector<128x1xi1> to vector<128x1xi1>
    %13 = arith.xori %9, %12 : vector<128x1xi1>
    %14 = arith.andi %13, %7 : vector<128x1xi1>
    %15 = vector.broadcast %3 : i32 to vector<128x1xi32>
    %16 = arith.addi %5, %15 : vector<128x1xi32>
    %17 = arith.select %14, %16, %5 : vector<128x1xi1>, vector<128x1xi32>
    %c0_i32_4 = arith.constant 0 : i32
    %18 = vector.broadcast %c0_i32_4 : i32 to vector<128x1xi32>
    %19 = arith.cmpi eq, %17, %18 : vector<128x1xi32>
    %c63_i32 = arith.constant 63 : i32
    %20 = vector.broadcast %c63_i32 : i32 to vector<128x1xi32>
    %21 = arith.cmpi eq, %17, %20 : vector<128x1xi32>
    %c1_i32_5 = arith.constant 1 : i32
    %22 = tpu.dynamic_rotate %0 by %c1_i32_5 dim 0 : vector<128x128xf32>, i32 -> vector<128x128xf32>
    %cst = arith.constant 0.000000e+00 : f32
    %23 = vector.shape_cast %19 : vector<128x1xi1> to vector<128x1xi1>
    %24 = vector.broadcast %23 : vector<128x1xi1> to vector<128x128xi1>
    %25 = vector.broadcast %cst : f32 to vector<128x128xf32>
    %26 = arith.select %24, %25, %22 : vector<128x128xi1>, vector<128x128xf32>
    %c127_i32 = arith.constant 127 : i32
    %27 = tpu.dynamic_rotate %0 by %c127_i32 dim 0 : vector<128x128xf32>, i32 -> vector<128x128xf32>
    %cst_6 = arith.constant 0.000000e+00 : f32
    %28 = vector.shape_cast %21 : vector<128x1xi1> to vector<128x1xi1>
    %29 = vector.broadcast %28 : vector<128x1xi1> to vector<128x128xi1>
    %30 = vector.broadcast %cst_6 : f32 to vector<128x128xf32>
    %31 = arith.select %29, %30, %27 : vector<128x128xi1>, vector<128x128xf32>
    %32 = tpu.concatenate %26, %0, %31 in 1 : vector<128x128xf32>, vector<128x128xf32>, vector<128x128xf32> -> vector<128x384xf32>
    %33 = arith.truncf %32 : vector<128x384xf32> to vector<128x384xbf16>
    %c0_7 = arith.constant 0 : index
    %c0_8 = arith.constant 0 : index
    %c0_9 = arith.constant 0 : index
    %34 = vector.load %arg3[%c0_7, %c0_8, %c0_9] : memref<2x384x128xbf16, #tpu.memory_space<vmem>>, vector<1x384x128xbf16>
    %35 = vector.shape_cast %34 : vector<1x384x128xbf16> to vector<384x128xbf16>
    %cst_10 = arith.constant dense<0.000000e+00> : vector<128x128xf32>
    %36 = tpu.matmul %33, %35, %cst_10 {dimension_numbers = #tpu.dot_dimension_numbers<[1], [0], [0], [1], [0, 0, 1, 1], [], []>} : vector<128x384xbf16>, vector<384x128xbf16>, vector<128x128xf32> -> vector<128x128xf32>
    %c0_11 = arith.constant 0 : index
    %c0_12 = arith.constant 0 : index
    %37 = vector.load %arg5[%c0_11, %c0_12] : memref<4x128xf32, #tpu.memory_space<vmem>>, vector<1x128xf32>
    %38 = vector.broadcast %37 : vector<1x128xf32> to vector<128x128xf32>
    %39 = arith.addf %36, %38 : vector<128x128xf32>
    %cst_13 = arith.constant 0.000000e+00 : f32
    %40 = vector.broadcast %cst_13 : f32 to vector<128x128xf32>
    %41 = arith.maximumf %39, %40 : vector<128x128xf32>
    %c1_i32_14 = arith.constant 1 : i32
    %42 = tpu.dynamic_rotate %41 by %c1_i32_14 dim 0 : vector<128x128xf32>, i32 -> vector<128x128xf32>
    %cst_15 = arith.constant 0.000000e+00 : f32
    %43 = vector.shape_cast %19 : vector<128x1xi1> to vector<128x1xi1>
    %44 = vector.broadcast %43 : vector<128x1xi1> to vector<128x128xi1>
    %45 = vector.broadcast %cst_15 : f32 to vector<128x128xf32>
    %46 = arith.select %44, %45, %42 : vector<128x128xi1>, vector<128x128xf32>
    %c127_i32_16 = arith.constant 127 : i32
    %47 = tpu.dynamic_rotate %41 by %c127_i32_16 dim 0 : vector<128x128xf32>, i32 -> vector<128x128xf32>
    %cst_17 = arith.constant 0.000000e+00 : f32
    %48 = vector.shape_cast %21 : vector<128x1xi1> to vector<128x1xi1>
    %49 = vector.broadcast %48 : vector<128x1xi1> to vector<128x128xi1>
    %50 = vector.broadcast %cst_17 : f32 to vector<128x128xf32>
    %51 = arith.select %49, %50, %47 : vector<128x128xi1>, vector<128x128xf32>
    %52 = tpu.concatenate %46, %41, %51 in 1 : vector<128x128xf32>, vector<128x128xf32>, vector<128x128xf32> -> vector<128x384xf32>
    %53 = arith.truncf %52 : vector<128x384xf32> to vector<128x384xbf16>
    %c1 = arith.constant 1 : index
    %c0_18 = arith.constant 0 : index
    %c0_19 = arith.constant 0 : index
    %54 = vector.load %arg3[%c1, %c0_18, %c0_19] : memref<2x384x128xbf16, #tpu.memory_space<vmem>>, vector<1x384x128xbf16>
    %55 = vector.shape_cast %54 : vector<1x384x128xbf16> to vector<384x128xbf16>
    %cst_20 = arith.constant dense<0.000000e+00> : vector<128x128xf32>
    %56 = tpu.matmul %53, %55, %cst_20 {dimension_numbers = #tpu.dot_dimension_numbers<[1], [0], [0], [1], [0, 0, 1, 1], [], []>} : vector<128x384xbf16>, vector<384x128xbf16>, vector<128x128xf32> -> vector<128x128xf32>
    %c1_21 = arith.constant 1 : index
    %c0_22 = arith.constant 0 : index
    %57 = vector.load %arg5[%c1_21, %c0_22] : memref<4x128xf32, #tpu.memory_space<vmem>>, vector<1x128xf32>
    %58 = vector.broadcast %57 : vector<1x128xf32> to vector<128x128xf32>
    %59 = arith.addf %56, %58 : vector<128x128xf32>
    %60 = arith.addf %59, %0 : vector<128x128xf32>
    %c0_23 = arith.constant 0 : index
    %c0_24 = arith.constant 0 : index
    %61 = vector.load %arg4[%c0_23, %c0_24] : memref<128x128xbf16, #tpu.memory_space<vmem>>, vector<128x128xbf16>
    %62 = arith.truncf %60 : vector<128x128xf32> to vector<128x128xbf16>
    %cst_25 = arith.constant dense<0.000000e+00> : vector<128x128xf32>
    %63 = tpu.matmul %62, %61, %cst_25 {dimension_numbers = #tpu.dot_dimension_numbers<[1], [0], [0], [1], [0, 0, 1, 1], [], []>} : vector<128x128xbf16>, vector<128x128xbf16>, vector<128x128xf32> -> vector<128x128xf32>
    %64 = arith.subf %60, %63 : vector<128x128xf32>
    %65 = arith.mulf %64, %64 : vector<128x128xf32>
    %66 = arith.truncf %65 : vector<128x128xf32> to vector<128x128xbf16>
    %cst_26 = arith.constant dense<0.000000e+00> : vector<128x128xf32>
    %67 = tpu.matmul %66, %61, %cst_26 {dimension_numbers = #tpu.dot_dimension_numbers<[1], [0], [0], [1], [0, 0, 1, 1], [], []>} : vector<128x128xbf16>, vector<128x128xbf16>, vector<128x128xf32> -> vector<128x128xf32>
    %cst_27 = arith.constant 9.99999974E-6 : f32
    %68 = vector.broadcast %cst_27 : f32 to vector<128x128xf32>
    %69 = arith.addf %67, %68 : vector<128x128xf32>
    %70 = math.rsqrt %69 : vector<128x128xf32>
    %71 = arith.mulf %64, %70 : vector<128x128xf32>
    %c2 = arith.constant 2 : index
    %c0_28 = arith.constant 0 : index
    %72 = vector.load %arg5[%c2, %c0_28] : memref<4x128xf32, #tpu.memory_space<vmem>>, vector<1x128xf32>
    %73 = vector.broadcast %72 : vector<1x128xf32> to vector<128x128xf32>
    %74 = arith.mulf %71, %73 : vector<128x128xf32>
    %c3 = arith.constant 3 : index
    %c0_29 = arith.constant 0 : index
    %75 = vector.load %arg5[%c3, %c0_29] : memref<4x128xf32, #tpu.memory_space<vmem>>, vector<1x128xf32>
    %76 = vector.broadcast %75 : vector<1x128xf32> to vector<128x128xf32>
    %77 = arith.addf %74, %76 : vector<128x128xf32>
    %78 = vector.shape_cast %77 : vector<128x128xf32> to vector<2x64x128xf32>
    %c0_30 = arith.constant 0 : index
    %c0_31 = arith.constant 0 : index
    %c0_32 = arith.constant 0 : index
    %79 = vector.load %arg2[%c0_30, %c0_31, %c0_32] : memref<2x2x128xf32, #tpu.memory_space<vmem>>, vector<2x1x128xf32>
    %80 = vector.broadcast %79 : vector<2x1x128xf32> to vector<2x64x128xf32>
    %81 = arith.mulf %80, %78 : vector<2x64x128xf32>
    %c0_33 = arith.constant 0 : index
    %c1_34 = arith.constant 1 : index
    %c0_35 = arith.constant 0 : index
    %82 = vector.load %arg2[%c0_33, %c1_34, %c0_35] : memref<2x2x128xf32, #tpu.memory_space<vmem>>, vector<2x1x128xf32>
    %83 = vector.broadcast %82 : vector<2x1x128xf32> to vector<2x64x128xf32>
    %84 = arith.addf %81, %83 : vector<2x64x128xf32>
    %85 = vector.shape_cast %84 : vector<2x64x128xf32> to vector<128x128xf32>
    %c0_36 = arith.constant 0 : index
    %c0_37 = arith.constant 0 : index
    %86 = vector.load %arg6[%c0_36, %c0_37] : memref<128x128xf32, #tpu.memory_space<vmem>>, vector<128x128xf32>
    tpu.vector_store %arg6[%c0_36, %c0_37], %85 {strides = array<i32>} : memref<128x128xf32, #tpu.memory_space<vmem>>, vector<128x128xf32>,
    return
  }
  func.func @transform_0(%arg0: i32) -> (i32, i32) {
    %c0_i32 = arith.constant 0 : i32
    %c0_i32_0 = arith.constant 0 : i32
    return %arg0, %c0_i32 : i32, i32
  }
  func.func @transform_1(%arg0: i32) -> (i32, i32, i32) {
    %c0_i32 = arith.constant 0 : i32
    %c0_i32_0 = arith.constant 0 : i32
    %c0_i32_1 = arith.constant 0 : i32
    return %arg0, %c0_i32, %c0_i32_0 : i32, i32, i32
  }
  func.func @transform_2(%arg0: i32) -> (i32, i32, i32) {
    %c0_i32 = arith.constant 0 : i32
    %c0_i32_0 = arith.constant 0 : i32
    %c0_i32_1 = arith.constant 0 : i32
    %c0_i32_2 = arith.constant 0 : i32
    return %c0_i32, %c0_i32_0, %c0_i32_1 : i32, i32, i32
  }
  func.func @transform_3(%arg0: i32) -> (i32, i32) {
    %c0_i32 = arith.constant 0 : i32
    %c0_i32_0 = arith.constant 0 : i32
    %c0_i32_1 = arith.constant 0 : i32
    return %c0_i32, %c0_i32_0 : i32, i32
  }
  func.func @transform_4(%arg0: i32) -> (i32, i32) {
    %c0_i32 = arith.constant 0 : i32
    %c0_i32_0 = arith.constant 0 : i32
    %c0_i32_1 = arith.constant 0 : i32
    return %c0_i32, %c0_i32_0 : i32, i32
  }
  func.func @transform_5(%arg0: i32) -> (i32, i32) {
    %c0_i32 = arith.constant 0 : i32
    %c0_i32_0 = arith.constant 0 : i32
    return %arg0, %c0_i32 : i32, i32
  }
}

</mosaic_0001>

<llo_original>
// kernel: tile.23
$region0: #{tile.23}
  #allocation0 [shape = 's32[1]{0}', space=sflag, size = 0x4, scoped, tag = 'scoped memory for tile.23']
  %s0 = inlined_call_operand.vmem [shape: f32[32], index: 0, kind: input, shape index: {}]
  %s1 = inlined_call_operand.vmem [shape: f32[4,32], index: 1, kind: output, shape index: {}]
  // Predicated region
  $region2: #{tile.23} parent=0 // pred_check
    _
  $region3: #{tile.23} parent=0 // pred_check_branch
    %3 = sbr.rel (0) target = $region5
  $region4: #{tile.23} parent=0 // pred_region
    _
  $region5: #{tile.23} parent=0 // pred_fallthru
    _
  %v4 = vld [vmem:[%s0] ss:$0 sm:$0xff]
  %5 = vst [vmem:[%s1] sm:$0xf] %v4

// kernel: tile.36
$region0: #{tile.36}
  %s0 = inlined_call_operand.vmem [shape: f32[4,32], index: 0, kind: input, shape index: {}]
  %s1 = inlined_call_operand.vmem [shape: f32[1,128], index: 1, kind: output, shape index: {}]
  $region1: #{tile.36} parent=0
    #allocation0 [shape = 'u8[4096]{0}', space=vmem, size = 0x1000, scoped, tag = 'scoped mem for output reshape']
    #allocation1 [shape = 'u8[4096]{0}', space=vmem, size = 0x1000, scoped, tag = 'scoped mem for input reshape']
    %s3 = ssub.s32 16, 1
    %v4 = vld [vmem:[%s0] sm:%s3]
    %5 = vst [vmem:[#allocation1] sm:%s3] %v4
    %v6 = vld [vmem:[#allocation1] sm:$0x1]
    %vm7 = vcmask 261120
    %8 = vst.msk [vmem:[#allocation0] sm:$0x1] %vm7, %v6
    %s9 = scalar_lea.vmem [#allocation1], 3
    %v10 = vld [vmem:[%s9] sm:$0x1]
    %11 = vrot.lane.b32.xlu0 %v10, 96
    %v12 = vpop.permute.xlu0 %11
    %vm13 = vcmask 1048320
    %14 = vst.msk [vmem:[#allocation0] sm:$0x1] %vm13, %v12
    %s15 = scalar_lea.vmem [#allocation1], 2
    %v16 = vld [vmem:[%s15] sm:$0x1]
    %17 = vrot.lane.b32.xlu0 %v16, 64
    %v18 = vpop.permute.xlu0 %17
    %vm19 = vcmask 785920
    %20 = vst.msk [vmem:[#allocation0] sm:$0x1] %vm19, %v18
    %s21 = scalar_lea.vmem [#allocation1], 1
    %v22 = vld [vmem:[%s21] sm:$0x1]
    %23 = vrot.lane.b32.xlu0 %v22, 32
    %v24 = vpop.permute.xlu0 %23
    %vm25 = vcmask 523520
    %26 = vst.msk [vmem:[#allocation0] sm:$0x1] %vm25, %v24
    %s28 = ssub.s32 2, 1
    %v29 = vld [vmem:[#allocation0] sm:%s28]
    %s31 = ssub.s32 2, 1
    %32 = vst [vmem:[%s1] sm:%s31] %v29

// kernel: position_wise_conv_ff.1
$region0: #{position_wise_conv_ff.1}
  #allocation0 [shape = 'u32[]', space=smem, size = 0x4, offset = 0x4, fixed_abs, tag = 'smem constant byte address 0x4 - core index']
  #allocation1 [shape = 'u32[72,128]{1,0:T(1,128)}', space=vmem, size = 0x9000, scoped, tag = 'internal scratch']
  %s0 = inlined_call_operand.vmem [shape: f32[256,128], index: 0, kind: input, shape index: {}]
  %s1 = inlined_call_operand.vmem [shape: f32[4,2,128], index: 1, kind: input, shape index: {}]
  %s2 = inlined_call_operand.vmem [shape: bf16[2,384,128], index: 2, kind: input, shape index: {}]
  %s3 = inlined_call_operand.vmem [shape: bf16[128,128], index: 3, kind: input, shape index: {}]
  %s4 = inlined_call_operand.vmem [shape: f32[4,128], index: 4, kind: input, shape index: {}]
  %s5 = inlined_call_operand.vmem [shape: f32[256,128], index: 5, kind: output, shape index: {}]
  %s6 = sld [smem:[#allocation0]]
  $region53: #{position_wise_conv_ff.1} parent=0
    _
  %s8 = ssub.s32 1, %s6
  %s9 = scalar_select 0, %s8, %s6
  loop: start=0, step=1, limit=4
  $region2: #{position_wise_conv_ff.1} parent=0 // loop_pre_header
    _
  $region3: #{position_wise_conv_ff.1} parent=0 // loop_header
    %s11 = sphi 0, %s15
    %p12 = scmp.ge.s32.totalorder %s11, 4
    %s21 = sphi 0, %s23
    %s24 = sphi 0, %s21
    %s25 = sphi 0, %s24
    %s41 = sphi 0, %s25
    %s47 = sphi 0, %s49
    %s50 = sphi 0, %s47
    %s51 = sphi 0, %s50
    %s67 = sphi 0, %s51
    %s71 = sphi 0, %s71
    %s73 = sphi 0, %s71
    %s74 = sphi 0, %s73
    %s88 = sphi 0, %s74
    %s92 = sphi 0, %s92
    %s94 = sphi 0, %s92
    %s95 = sphi 0, %s94
    %s109 = sphi 0, %s95
    %s113 = sphi 0, %s113
    %s115 = sphi 0, %s113
    %s116 = sphi 0, %s115
    %s130 = sphi 0, %s116
    %s136 = sphi 0, %s138
    %s139 = sphi 0, %s136
    %s140 = sphi 0, %s139
    %s156 = sphi 0, %s140
  $region4: #{position_wise_conv_ff.1} parent=0 // loop_header_branch
    %14 = sbr.rel (%p12) target = $region8
  $region5: #{position_wise_conv_ff.1} parent=0 // loop_body
    %s16 = ssub.s32 %s11, 1
    %s17 = ssub.s32 %s11, 2
    %s18 = sadd.s32 %s11, 1
    %s19 = ssub.s32 %s11, %s18
    %p20 = scmp.eq.s32.totalorder %s19, 0
    %s22 = sadd.s32 %s21, 1
    %s23 = scalar_select %p20, %s21, %s22
    %p26 = pneg %p20
    %p27 = scmp.eq.s32.totalorder %s11, 1
    %p28 = por %p26, %p27
    %p29 = scmp.ne.s32.totalorder %s21, %s24
    %p30 = scmp.eq.s32.totalorder %s11, 0
    %p31 = por %p29, %p30
    %p32 = scmp.ne.s32.totalorder %s21, %s24
    %p33 = scmp.eq.s32.totalorder %s16, 1
    %p34 = por %p32, %p33
    %p35 = scmp.ne.s32.totalorder %s24, %s25
    %p36 = scmp.eq.s32.totalorder %s16, 0
    %p37 = por %p35, %p36
    %p38 = scmp.ne.s32.totalorder %s24, %s25
    %p39 = scmp.eq.s32.totalorder %s17, 1
    %p40 = por %p38, %p39
    %p42 = scmp.ne.s32.totalorder %s25, %s41
    %p43 = scmp.eq.s32.totalorder %s17, 0
    %p44 = por %p42, %p43
    %s45 = ssub.s32 %s11, %s18
    %p46 = scmp.eq.s32.totalorder %s45, 0
    %s48 = sadd.s32 %s47, 1
    %s49 = scalar_select %p46, %s47, %s48
    %p52 = pneg %p46
    %p53 = scmp.eq.s32.totalorder %s11, 1
    %p54 = por %p52, %p53
    %p55 = scmp.ne.s32.totalorder %s47, %s50
    %p56 = scmp.eq.s32.totalorder %s11, 0
    %p57 = por %p55, %p56
    %p58 = scmp.ne.s32.totalorder %s47, %s50
    %p59 = scmp.eq.s32.totalorder %s16, 1
    %p60 = por %p58, %p59
    %p61 = scmp.ne.s32.totalorder %s50, %s51
    %p62 = scmp.eq.s32.totalorder %s16, 0
    %p63 = por %p61, %p62
    %p64 = scmp.ne.s32.totalorder %s50, %s51
    %p65 = scmp.eq.s32.totalorder %s17, 1
    %p66 = por %p64, %p65
    %p68 = scmp.ne.s32.totalorder %s51, %s67
    %p69 = scmp.eq.s32.totalorder %s17, 0
    %p70 = por %p68, %p69
    %s72 = sadd.s32 %s71, 1
    %p75 = scmp.eq.s32.totalorder %s11, 1
    %p76 = scmp.ne.s32.totalorder %s71, %s73
    %p77 = scmp.eq.s32.totalorder %s11, 0
    %p78 = por %p76, %p77
    %p79 = scmp.ne.s32.totalorder %s71, %s73
    %p80 = scmp.eq.s32.totalorder %s16, 1
    %p81 = por %p79, %p80
    %p82 = scmp.ne.s32.totalorder %s73, %s74
    %p83 = scmp.eq.s32.totalorder %s16, 0
    %p84 = por %p82, %p83
    %p85 = scmp.ne.s32.totalorder %s73, %s74
    %p86 = scmp.eq.s32.totalorder %s17, 1
    %p87 = por %p85, %p86
    %p89 = scmp.ne.s32.totalorder %s74, %s88
    %p90 = scmp.eq.s32.totalorder %s17, 0
    %p91 = por %p89, %p90
    %s93 = sadd.s32 %s92, 1
    %p96 = scmp.eq.s32.totalorder %s11, 1
    %p97 = scmp.ne.s32.totalorder %s92, %s94
    %p98 = scmp.eq.s32.totalorder %s11, 0
    %p99 = por %p97, %p98
    %p100 = scmp.ne.s32.totalorder %s92, %s94
    %p101 = scmp.eq.s32.totalorder %s16, 1
    %p102 = por %p100, %p101
    %p103 = scmp.ne.s32.totalorder %s94, %s95
    %p104 = scmp.eq.s32.totalorder %s16, 0
    %p105 = por %p103, %p104
    %p106 = scmp.ne.s32.totalorder %s94, %s95
    %p107 = scmp.eq.s32.totalorder %s17, 1
    %p108 = por %p106, %p107
    %p110 = scmp.ne.s32.totalorder %s95, %s109
    %p111 = scmp.eq.s32.totalorder %s17, 0
    %p112 = por %p110, %p111
    %s114 = sadd.s32 %s113, 1
    %p117 = scmp.eq.s32.totalorder %s11, 1
    %p118 = scmp.ne.s32.totalorder %s113, %s115
    %p119 = scmp.eq.s32.totalorder %s11, 0
    %p120 = por %p118, %p119
    %p121 = scmp.ne.s32.totalorder %s113, %s115
    %p122 = scmp.eq.s32.totalorder %s16, 1
    %p123 = por %p121, %p122
    %p124 = scmp.ne.s32.totalorder %s115, %s116
    %p125 = scmp.eq.s32.totalorder %s16, 0
    %p126 = por %p124, %p125
    %p127 = scmp.ne.s32.totalorder %s115, %s116
    %p128 = scmp.eq.s32.totalorder %s17, 1
    %p129 = por %p127, %p128
    %p131 = scmp.ne.s32.totalorder %s116, %s130
    %p132 = scmp.eq.s32.totalorder %s17, 0
    %p133 = por %p131, %p132
    %s134 = ssub.s32 %s11, %s18
    %p135 = scmp.eq.s32.totalorder %s134, 0
    %s137 = sadd.s32 %s136, 1
    %s138 = scalar_select %p135, %s136, %s137
    %p141 = pneg %p135
    %p142 = scmp.eq.s32.totalorder %s11, 1
    %p143 = por %p141, %p142
    %p144 = scmp.ne.s32.totalorder %s136, %s139
    %p145 = scmp.eq.s32.totalorder %s11, 0
    %p146 = por %p144, %p145
    %p147 = scmp.ne.s32.totalorder %s136, %s139
    %p148 = scmp.eq.s32.totalorder %s16, 1
    %p149 = por %p147, %p148
    %p150 = scmp.ne.s32.totalorder %s139, %s140
    %p151 = scmp.eq.s32.totalorder %s16, 0
    %p152 = por %p150, %p151
    %p153 = scmp.ne.s32.totalorder %s139, %s140
    %p154 = scmp.eq.s32.totalorder %s17, 1
    %p155 = por %p153, %p154
    %p157 = scmp.ne.s32.totalorder %s140, %s156
    %p158 = scmp.eq.s32.totalorder %s17, 0
    %p159 = por %p157, %p158
    %p160 = scmp.le.s32.totalorder 1, %s11
    %p161 = scmp.lt.s32.totalorder %s11, 3
    %p162 = pnand %p160, %p161
    %p163 = pneg %p162
    // Predicated region
    $region9: #{position_wise_conv_ff.1} parent=5 // pred_check
      _
    $region10: #{position_wise_conv_ff.1} parent=5 // pred_check_branch
      %165 = sbr.rel (%p162) target = $region12
    $region11: #{position_wise_conv_ff.1} parent=5 // pred_region
      %s166 = ssub.s32 %s11, 1
      // Predicated region
      $region13: #{position_wise_conv_ff.1} parent=11 // pred_check
        %p167 = pneg %p84
      $region14: #{position_wise_conv_ff.1} parent=11 // pred_check_branch
        %169 = sbr.rel (%p167) target = $region16
      $region15: #{position_wise_conv_ff.1} parent=11 // pred_region
        _
      $region16: #{position_wise_conv_ff.1} parent=11 // pred_fallthru
        _
      // Predicated region
      $region17: #{position_wise_conv_ff.1} parent=11 // pred_check
        %p170 = pneg %p105
      $region18: #{position_wise_conv_ff.1} parent=11 // pred_check_branch
        %172 = sbr.rel (%p170) target = $region20
      $region19: #{position_wise_conv_ff.1} parent=11 // pred_region
        _
      $region20: #{position_wise_conv_ff.1} parent=11 // pred_fallthru
        _
      // Predicated region
      $region21: #{position_wise_conv_ff.1} parent=11 // pred_check
        %p173 = pneg %p126
      $region22: #{position_wise_conv_ff.1} parent=11 // pred_check_branch
        %175 = sbr.rel (%p173) target = $region24
      $region23: #{position_wise_conv_ff.1} parent=11 // pred_region
        _
      $region24: #{position_wise_conv_ff.1} parent=11 // pred_fallthru
        _
    $region12: #{position_wise_conv_ff.1} parent=5 // pred_fallthru
      _
    %p176 = scmp.lt.s32.totalorder %s11, 2
    // Predicated region
    $region25: #{position_wise_conv_ff.1} parent=5 // pred_check
      %p177 = pneg %p176
    $region26: #{position_wise_conv_ff.1} parent=5 // pred_check_branch
      %179 = sbr.rel (%p177) target = $region28
    $region27: #{position_wise_conv_ff.1} parent=5 // pred_region
      // Predicated region
      $region29: #{position_wise_conv_ff.1} parent=27 // pred_check
        %p180 = pneg %p31
      $region30: #{position_wise_conv_ff.1} parent=27 // pred_check_branch
        %182 = sbr.rel (%p180) target = $region32
      $region31: #{position_wise_conv_ff.1} parent=27 // pred_region
        %s183 = smul.u32 16, %s11
        %p184 = scmp.lt.s32.totalorder %s183, 31
        %s185 = scalar_select %p184, %s183, 31
        %s186 = smul.addr %s185, 8
        %s187 = scalar_lea.vmem %s0, %s186
        %s188 = smul.u32 16, %s11
      $region32: #{position_wise_conv_ff.1} parent=27 // pred_fallthru
        _
      // Predicated region
      $region33: #{position_wise_conv_ff.1} parent=27 // pred_check
        %p189 = pneg %p57
      $region34: #{position_wise_conv_ff.1} parent=27 // pred_check_branch
        %191 = sbr.rel (%p189) target = $region36
      $region35: #{position_wise_conv_ff.1} parent=27 // pred_region
        %s192 = smul.u32 2, %s11
        %p193 = scmp.lt.s32.totalorder %s192, 3
        %s194 = scalar_select %p193, %s192, 3
        %s195 = smul.addr %s194, 2
        %s196 = scalar_lea.vmem %s1, %s195
        %s197 = smul.u32 2, %s11
      $region36: #{position_wise_conv_ff.1} parent=27 // pred_fallthru
        _
    $region28: #{position_wise_conv_ff.1} parent=5 // pred_fallthru
      _
    %p198 = scmp.le.s32.totalorder 1, %s11
    %p199 = scmp.lt.s32.totalorder %s11, 3
    %p200 = pnand %p198, %p199
    %p201 = pneg %p200
    // Predicated region
    $region37: #{position_wise_conv_ff.1} parent=5 // pred_check
      _
    $region38: #{position_wise_conv_ff.1} parent=5 // pred_check_branch
      %203 = sbr.rel (%p200) target = $region40
    $region39: #{position_wise_conv_ff.1} parent=5 // pred_region
      %s204 = ssub.s32 %s11, 1
      %s205 = smul.u32 16, %s16
      %p206 = scmp.lt.s32.totalorder %s205, 31
      %s207 = scalar_select %p206, %s205, 31
      %s208 = smul.addr %s207, 8
      %s209 = scalar_lea.vmem %s0, %s208
      %p210 = pneg %p37
      %p211 = pneg %p34
      %s212 = smul.u32 2, %s16
      %p213 = scmp.lt.s32.totalorder %s212, 3
      %s214 = scalar_select %p213, %s212, 3
      %s215 = smul.addr %s214, 2
      %s216 = scalar_lea.vmem %s1, %s215
      %p217 = pneg %p63
      %p218 = pneg %p60
      %p219 = pneg %p84
      %p220 = pneg %p81
      %p221 = pneg %p105
      %p222 = pneg %p102
      %p223 = pneg %p126
      %p224 = pneg %p123
      %p225 = pneg %p152
      %p226 = pneg %p149
      %s227 = smul.u32 16, %s16
      %p228 = scmp.lt.s32.totalorder %s227, 31
      %s229 = scalar_select %p228, %s227, 31
      %s230 = smul.addr %s229, 8
      %s231 = scalar_lea.vmem %s5, %s230
      %s232 = smul.u32 16, %s16
      %p233 = scmp.lt.s32.totalorder %s232, 31
      %s234 = scalar_select %p233, %s232, 31
      %s235 = smul.addr %s234, 8
      %s236 = scalar_lea.vmem %s0, %s235
      %s237 = smul.u32 16, %s16
      %s238 = smul.u32 2, %s16
      %p239 = scmp.lt.s32.totalorder %s238, 3
      %s240 = scalar_select %p239, %s238, 3
      %s241 = smul.addr %s240, 2
      %s242 = scalar_lea.vmem %s1, %s241
      %s243 = smul.u32 2, %s16
      %s244 = smul.u32 16, %s16
      %p245 = scmp.lt.s32.totalorder %s244, 31
      %s246 = scalar_select %p245, %s244, 31
      %s247 = smul.addr %s246, 8
      %s248 = scalar_lea.vmem %s5, %s247
      %s249 = smul.u32 16, %s16
      %v250 = vld [vmem:[%s236] sm:$0xff]
      %v251 = vld [vmem:[%s236 + $0x8] sm:$0xff]
      %v252 = vld [vmem:[%s236 + $0x10] sm:$0xff]
      %v253 = vld [vmem:[%s236 + $0x18] sm:$0xff]
      %v254 = vld [vmem:[%s236 + $0x20] sm:$0xff]
      %v255 = vld [vmem:[%s236 + $0x28] sm:$0xff]
      %v256 = vld [vmem:[%s236 + $0x30] sm:$0xff]
      %v257 = vld [vmem:[%s236 + $0x38] sm:$0xff]
      %v258 = vld [vmem:[%s236 + $0x40] sm:$0xff]
      %v259 = vld [vmem:[%s236 + $0x48] sm:$0xff]
      %v260 = vld [vmem:[%s236 + $0x50] sm:$0xff]
      %v261 = vld [vmem:[%s236 + $0x58] sm:$0xff]
      %v262 = vld [vmem:[%s236 + $0x60] sm:$0xff]
      %v263 = vld [vmem:[%s236 + $0x68] sm:$0xff]
      %v264 = vld [vmem:[%s236 + $0x70] sm:$0xff]
      %v265 = vld [vmem:[%s236 + $0x78] sm:$0xff]
      %v266 = vlaneseq
      %v267 = vshrl.u32 %v266, 7
      %v268 = vadd.s32 %v267, 8
      %v269 = vadd.s32 %v267, 16
      %v270 = vadd.s32 %v267, 24
      %v271 = vadd.s32 %v267, 32
      %v272 = vadd.s32 %v267, 40
      %v273 = vadd.s32 %v267, 48
      %v274 = vadd.s32 %v267, 56
      %v275 = vadd.s32 %v267, 64
      %v276 = vadd.s32 %v267, 72
      %v277 = vadd.s32 %v267, 80
      %v278 = vadd.s32 %v267, 88
      %v279 = vadd.s32 %v267, 96
      %v280 = vadd.s32 %v267, 104
      %v281 = vadd.s32 %v267, 112
      %v282 = vadd.s32 %v267, 120
      %vm283 = vcmp.lt.s32.totalorder %v267, 0
      %v284 = vsub.s32 0, %v267
      %v285 = vsel %vm283, %v284, %v267
      %v286 = vshrl.u32 %v285, 6
      %v287 = vand.u32 %v285, 63
      %v288 = vsub.s32 0, %v287
      %v289 = vsel %vm283, %v288, %v287
      %vm290 = vcmp.lt.s32.totalorder %v268, 0
      %v291 = vsub.s32 0, %v268
      %v292 = vsel %vm290, %v291, %v268
      %v293 = vshrl.u32 %v292, 6
      %v294 = vand.u32 %v292, 63
      %v295 = vsub.s32 0, %v294
      %v296 = vsel %vm290, %v295, %v294
      %vm297 = vcmp.lt.s32.totalorder %v269, 0
      %v298 = vsub.s32 0, %v269
      %v299 = vsel %vm297, %v298, %v269
      %v300 = vshrl.u32 %v299, 6
      %v301 = vand.u32 %v299, 63
      %v302 = vsub.s32 0, %v301
      %v303 = vsel %vm297, %v302, %v301
      %vm304 = vcmp.lt.s32.totalorder %v270, 0
      %v305 = vsub.s32 0, %v270
      %v306 = vsel %vm304, %v305, %v270
      %v307 = vshrl.u32 %v306, 6
      %v308 = vand.u32 %v306, 63
      %v309 = vsub.s32 0, %v308
      %v310 = vsel %vm304, %v309, %v308
      %vm311 = vcmp.lt.s32.totalorder %v271, 0
      %v312 = vsub.s32 0, %v271
      %v313 = vsel %vm311, %v312, %v271
      %v314 = vshrl.u32 %v313, 6
      %v315 = vand.u32 %v313, 63
      %v316 = vsub.s32 0, %v315
      %v317 = vsel %vm311, %v316, %v315
      %vm318 = vcmp.lt.s32.totalorder %v272, 0
      %v319 = vsub.s32 0, %v272
      %v320 = vsel %vm318, %v319, %v272
      %v321 = vshrl.u32 %v320, 6
      %v322 = vand.u32 %v320, 63
      %v323 = vsub.s32 0, %v322
      %v324 = vsel %vm318, %v323, %v322
      %vm325 = vcmp.lt.s32.totalorder %v273, 0
      %v326 = vsub.s32 0, %v273
      %v327 = vsel %vm325, %v326, %v273
      %v328 = vshrl.u32 %v327, 6
      %v329 = vand.u32 %v327, 63
      %v330 = vsub.s32 0, %v329
      %v331 = vsel %vm325, %v330, %v329
      %vm332 = vcmp.lt.s32.totalorder %v274, 0
      %v333 = vsub.s32 0, %v274
      %v334 = vsel %vm332, %v333, %v274
      %v335 = vshrl.u32 %v334, 6
      %v336 = vand.u32 %v334, 63
      %v337 = vsub.s32 0, %v336
      %v338 = vsel %vm332, %v337, %v336
      %vm339 = vcmp.lt.s32.totalorder %v275, 0
      %v340 = vsub.s32 0, %v275
      %v341 = vsel %vm339, %v340, %v275
      %v342 = vshrl.u32 %v341, 6
      %v343 = vand.u32 %v341, 63
      %v344 = vsub.s32 0, %v343
      %v345 = vsel %vm339, %v344, %v343
      %vm346 = vcmp.lt.s32.totalorder %v276, 0
      %v347 = vsub.s32 0, %v276
      %v348 = vsel %vm346, %v347, %v276
      %v349 = vshrl.u32 %v348, 6
      %v350 = vand.u32 %v348, 63
      %v351 = vsub.s32 0, %v350
      %v352 = vsel %vm346, %v351, %v350
      %vm353 = vcmp.lt.s32.totalorder %v277, 0
      %v354 = vsub.s32 0, %v277
      %v355 = vsel %vm353, %v354, %v277
      %v356 = vshrl.u32 %v355, 6
      %v357 = vand.u32 %v355, 63
      %v358 = vsub.s32 0, %v357
      %v359 = vsel %vm353, %v358, %v357
      %vm360 = vcmp.lt.s32.totalorder %v278, 0
      %v361 = vsub.s32 0, %v278
      %v362 = vsel %vm360, %v361, %v278
      %v363 = vshrl.u32 %v362, 6
      %v364 = vand.u32 %v362, 63
      %v365 = vsub.s32 0, %v364
      %v366 = vsel %vm360, %v365, %v364
      %vm367 = vcmp.lt.s32.totalorder %v279, 0
      %v368 = vsub.s32 0, %v279
      %v369 = vsel %vm367, %v368, %v279
      %v370 = vshrl.u32 %v369, 6
      %v371 = vand.u32 %v369, 63
      %v372 = vsub.s32 0, %v371
      %v373 = vsel %vm367, %v372, %v371
      %vm374 = vcmp.lt.s32.totalorder %v280, 0
      %v375 = vsub.s32 0, %v280
      %v376 = vsel %vm374, %v375, %v280
      %v377 = vshrl.u32 %v376, 6
      %v378 = vand.u32 %v376, 63
      %v379 = vsub.s32 0, %v378
      %v380 = vsel %vm374, %v379, %v378
      %vm381 = vcmp.lt.s32.totalorder %v281, 0
      %v382 = vsub.s32 0, %v281
      %v383 = vsel %vm381, %v382, %v281
      %v384 = vshrl.u32 %v383, 6
      %v385 = vand.u32 %v383, 63
      %v386 = vsub.s32 0, %v385
      %v387 = vsel %vm381, %v386, %v385
      %vm388 = vcmp.lt.s32.totalorder %v282, 0
      %v389 = vsub.s32 0, %v282
      %v390 = vsel %vm388, %v389, %v282
      %v391 = vshrl.u32 %v390, 6
      %v392 = vand.u32 %v390, 63
      %v393 = vsub.s32 0, %v392
      %v394 = vsel %vm388, %v393, %v392
      %vm395 = vcmp.ne.s32.totalorder %v289, 0
      %vm396 = vcmp.ne.s32.totalorder %v296, 0
      %vm397 = vcmp.ne.s32.totalorder %v303, 0
      %vm398 = vcmp.ne.s32.totalorder %v310, 0
      %vm399 = vcmp.ne.s32.totalorder %v317, 0
      %vm400 = vcmp.ne.s32.totalorder %v324, 0
      %vm401 = vcmp.ne.s32.totalorder %v331, 0
      %vm402 = vcmp.ne.s32.totalorder %v338, 0
      %vm403 = vcmp.ne.s32.totalorder %v345, 0
      %vm404 = vcmp.ne.s32.totalorder %v352, 0
      %vm405 = vcmp.ne.s32.totalorder %v359, 0
      %vm406 = vcmp.ne.s32.totalorder %v366, 0
      %vm407 = vcmp.ne.s32.totalorder %v373, 0
      %vm408 = vcmp.ne.s32.totalorder %v380, 0
      %vm409 = vcmp.ne.s32.totalorder %v387, 0
      %vm410 = vcmp.ne.s32.totalorder %v394, 0
      %vm411 = vcmp.lt.s32.totalorder %v289, 0
      %vm412 = vcmp.lt.s32.totalorder %v296, 0
      %vm413 = vcmp.lt.s32.totalorder %v303, 0
      %vm414 = vcmp.lt.s32.totalorder %v310, 0
      %vm415 = vcmp.lt.s32.totalorder %v317, 0
      %vm416 = vcmp.lt.s32.totalorder %v324, 0
      %vm417 = vcmp.lt.s32.totalorder %v331, 0
      %vm418 = vcmp.lt.s32.totalorder %v338, 0
      %vm419 = vcmp.lt.s32.totalorder %v345, 0
      %vm420 = vcmp.lt.s32.totalorder %v352, 0
      %vm421 = vcmp.lt.s32.totalorder %v359, 0
      %vm422 = vcmp.lt.s32.totalorder %v366, 0
      %vm423 = vcmp.lt.s32.totalorder %v373, 0
      %vm424 = vcmp.lt.s32.totalorder %v380, 0
      %vm425 = vcmp.lt.s32.totalorder %v387, 0
      %vm426 = vcmp.lt.s32.totalorder %v394, 0
      %vm427 = vmand %vm411, %vm395
      %vm428 = vmand %vm412, %vm396
      %vm429 = vmand %vm413, %vm397
      %vm430 = vmand %vm414, %vm398
      %vm431 = vmand %vm415, %vm399
      %vm432 = vmand %vm416, %vm400
      %vm433 = vmand %vm417, %vm401
      %vm434 = vmand %vm418, %vm402
      %vm435 = vmand %vm419, %vm403
      %vm436 = vmand %vm420, %vm404
      %vm437 = vmand %vm421, %vm405
      %vm438 = vmand %vm422, %vm406
      %vm439 = vmand %vm423, %vm407
      %vm440 = vmand %vm424, %vm408
      %vm441 = vmand %vm425, %vm409
      %vm442 = vmand %vm426, %vm410
      %v443 = vadd.s32 %v289, 64
      %v444 = vadd.s32 %v296, 64
      %v445 = vadd.s32 %v303, 64
      %v446 = vadd.s32 %v310, 64
      %v447 = vadd.s32 %v317, 64
      %v448 = vadd.s32 %v324, 64
      %v449 = vadd.s32 %v331, 64
      %v450 = vadd.s32 %v338, 64
      %v451 = vadd.s32 %v345, 64
      %v452 = vadd.s32 %v352, 64
      %v453 = vadd.s32 %v359, 64
      %v454 = vadd.s32 %v366, 64
      %v455 = vadd.s32 %v373, 64
      %v456 = vadd.s32 %v380, 64
      %v457 = vadd.s32 %v387, 64
      %v458 = vadd.s32 %v394, 64
      %v459 = vsel %vm427, %v443, %v289
      %v460 = vsel %vm428, %v444, %v296
      %v461 = vsel %vm429, %v445, %v303
      %v462 = vsel %vm430, %v446, %v310
      %v463 = vsel %vm431, %v447, %v317
      %v464 = vsel %vm432, %v448, %v324
      %v465 = vsel %vm433, %v449, %v331
      %v466 = vsel %vm434, %v450, %v338
      %v467 = vsel %vm435, %v451, %v345
      %v468 = vsel %vm436, %v452, %v352
      %v469 = vsel %vm437, %v453, %v359
      %v470 = vsel %vm438, %v454, %v366
      %v471 = vsel %vm439, %v455, %v373
      %v472 = vsel %vm440, %v456, %v380
      %v473 = vsel %vm441, %v457, %v387
      %v474 = vsel %vm442, %v458, %v394
      %vm475 = vcmp.eq.s32.totalorder %v459, 0
      %vm476 = vcmp.eq.s32.totalorder %v460, 0
      %vm477 = vcmp.eq.s32.totalorder %v461, 0
      %vm478 = vcmp.eq.s32.totalorder %v462, 0
      %vm479 = vcmp.eq.s32.totalorder %v463, 0
      %vm480 = vcmp.eq.s32.totalorder %v464, 0
      %vm481 = vcmp.eq.s32.totalorder %v465, 0
      %vm482 = vcmp.eq.s32.totalorder %v466, 0
      %vm483 = vcmp.eq.s32.totalorder %v467, 0
      %vm484 = vcmp.eq.s32.totalorder %v468, 0
      %vm485 = vcmp.eq.s32.totalorder %v469, 0
      %vm486 = vcmp.eq.s32.totalorder %v470, 0
      %vm487 = vcmp.eq.s32.totalorder %v471, 0
      %vm488 = vcmp.eq.s32.totalorder %v472, 0
      %vm489 = vcmp.eq.s32.totalorder %v473, 0
      %vm490 = vcmp.eq.s32.totalorder %v474, 0
      %vm491 = vcmp.eq.s32.totalorder %v459, 63
      %vm492 = vcmp.eq.s32.totalorder %v460, 63
      %vm493 = vcmp.eq.s32.totalorder %v461, 63
      %vm494 = vcmp.eq.s32.totalorder %v462, 63
      %vm495 = vcmp.eq.s32.totalorder %v463, 63
      %vm496 = vcmp.eq.s32.totalorder %v464, 63
      %vm497 = vcmp.eq.s32.totalorder %v465, 63
      %vm498 = vcmp.eq.s32.totalorder %v466, 63
      %vm499 = vcmp.eq.s32.totalorder %v467, 63
      %vm500 = vcmp.eq.s32.totalorder %v468, 63
      %vm501 = vcmp.eq.s32.totalorder %v469, 63
      %vm502 = vcmp.eq.s32.totalorder %v470, 63
      %vm503 = vcmp.eq.s32.totalorder %v471, 63
      %vm504 = vcmp.eq.s32.totalorder %v472, 63
      %vm505 = vcmp.eq.s32.totalorder %v473, 63
      %vm506 = vcmp.eq.s32.totalorder %v474, 63
      %v507 = vrot.slane %v250, 7
      %v508 = vrot.slane %v251, 7
      %v509 = vrot.slane %v252, 7
      %v510 = vrot.slane %v253, 7
      %v511 = vrot.slane %v254, 7
      %v512 = vrot.slane %v255, 7
      %v513 = vrot.slane %v256, 7
      %v514 = vrot.slane %v257, 7
      %v515 = vrot.slane %v258, 7
      %v516 = vrot.slane %v259, 7
      %v517 = vrot.slane %v260, 7
      %v518 = vrot.slane %v261, 7
      %v519 = vrot.slane %v262, 7
      %v520 = vrot.slane %v263, 7
      %v521 = vrot.slane %v264, 7
      %v522 = vrot.slane %v265, 7
      %vm523 = vcmp.lt.s32.totalorder %v267, 1
      %v524 = vsel %vm523, %v521, %v522
      %v525 = vsel %vm523, %v520, %v521
      %v526 = vsel %vm523, %v519, %v520
      %v527 = vsel %vm523, %v518, %v519
      %v528 = vsel %vm523, %v517, %v518
      %v529 = vsel %vm523, %v516, %v517
      %v530 = vsel %vm523, %v515, %v516
      %v531 = vsel %vm523, %v514, %v515
      %v532 = vsel %vm523, %v513, %v514
      %v533 = vsel %vm523, %v512, %v513
      %v534 = vsel %vm523, %v511, %v512
      %v535 = vsel %vm523, %v510, %v511
      %v536 = vsel %vm523, %v509, %v510
      %v537 = vsel %vm523, %v508, %v509
      %v538 = vsel %vm523, %v507, %v508
      %v539 = vsel %vm523, %v522, %v507
      %v540 = vsel %vm475, 1, 0
      %v541 = vsel %vm476, 1, 0
      %v542 = vsel %vm477, 1, 0
      %v543 = vsel %vm478, 1, 0
      %v544 = vsel %vm479, 1, 0
      %v545 = vsel %vm480, 1, 0
      %v546 = vsel %vm481, 1, 0
      %v547 = vsel %vm482, 1, 0
      %v548 = vsel %vm483, 1, 0
      %v549 = vsel %vm484, 1, 0
      %v550 = vsel %vm485, 1, 0
      %v551 = vsel %vm486, 1, 0
      %v552 = vsel %vm487, 1, 0
      %v553 = vsel %vm488, 1, 0
      %v554 = vsel %vm489, 1, 0
      %v555 = vsel %vm490, 1, 0
      %vm556 = vcmp.eq.s32.totalorder %v540, 1
      %vm557 = vcmp.eq.s32.totalorder %v541, 1
      %vm558 = vcmp.eq.s32.totalorder %v542, 1
      %vm559 = vcmp.eq.s32.totalorder %v543, 1
      %vm560 = vcmp.eq.s32.totalorder %v544, 1
      %vm561 = vcmp.eq.s32.totalorder %v545, 1
      %vm562 = vcmp.eq.s32.totalorder %v546, 1
      %vm563 = vcmp.eq.s32.totalorder %v547, 1
      %vm564 = vcmp.eq.s32.totalorder %v548, 1
      %vm565 = vcmp.eq.s32.totalorder %v549, 1
      %vm566 = vcmp.eq.s32.totalorder %v550, 1
      %vm567 = vcmp.eq.s32.totalorder %v551, 1
      %vm568 = vcmp.eq.s32.totalorder %v552, 1
      %vm569 = vcmp.eq.s32.totalorder %v553, 1
      %vm570 = vcmp.eq.s32.totalorder %v554, 1
      %vm571 = vcmp.eq.s32.totalorder %v555, 1
      %v572 = vsel %vm556, 0.0, %v539
      %v573 = vsel %vm557, 0.0, %v538
      %v574 = vsel %vm558, 0.0, %v537
      %v575 = vsel %vm559, 0.0, %v536
      %v576 = vsel %vm560, 0.0, %v535
      %v577 = vsel %vm561, 0.0, %v534
      %v578 = vsel %vm562, 0.0, %v533
      %v579 = vsel %vm563, 0.0, %v532
      %v580 = vsel %vm564, 0.0, %v531
      %v581 = vsel %vm565, 0.0, %v530
      %v582 = vsel %vm566, 0.0, %v529
      %v583 = vsel %vm567, 0.0, %v528
      %v584 = vsel %vm568, 0.0, %v527
      %v585 = vsel %vm569, 0.0, %v526
      %v586 = vsel %vm570, 0.0, %v525
      %v587 = vsel %vm571, 0.0, %v524
      %v588 = vrot.slane %v250, 1
      %v589 = vrot.slane %v251, 1
      %v590 = vrot.slane %v252, 1
      %v591 = vrot.slane %v253, 1
      %v592 = vrot.slane %v254, 1
      %v593 = vrot.slane %v255, 1
      %v594 = vrot.slane %v256, 1
      %v595 = vrot.slane %v257, 1
      %v596 = vrot.slane %v258, 1
      %v597 = vrot.slane %v259, 1
      %v598 = vrot.slane %v260, 1
      %v599 = vrot.slane %v261, 1
      %v600 = vrot.slane %v262, 1
      %v601 = vrot.slane %v263, 1
      %v602 = vrot.slane %v264, 1
      %v603 = vrot.slane %v265, 1
      %vm604 = vcmp.lt.s32.totalorder %v267, 7
      %v605 = vsel %vm604, %v602, %v603
      %v606 = vsel %vm604, %v601, %v602
      %v607 = vsel %vm604, %v600, %v601
      %v608 = vsel %vm604, %v599, %v600
      %v609 = vsel %vm604, %v598, %v599
      %v610 = vsel %vm604, %v597, %v598
      %v611 = vsel %vm604, %v596, %v597
      %v612 = vsel %vm604, %v595, %v596
      %v613 = vsel %vm604, %v594, %v595
      %v614 = vsel %vm604, %v593, %v594
      %v615 = vsel %vm604, %v592, %v593
      %v616 = vsel %vm604, %v591, %v592
      %v617 = vsel %vm604, %v590, %v591
      %v618 = vsel %vm604, %v589, %v590
      %v619 = vsel %vm604, %v588, %v589
      %v620 = vsel %vm604, %v603, %v588
      %v621 = vsel %vm491, 1, 0
      %v622 = vsel %vm492, 1, 0
      %v623 = vsel %vm493, 1, 0
      %v624 = vsel %vm494, 1, 0
      %v625 = vsel %vm495, 1, 0
      %v626 = vsel %vm496, 1, 0
      %v627 = vsel %vm497, 1, 0
      %v628 = vsel %vm498, 1, 0
      %v629 = vsel %vm499, 1, 0
      %v630 = vsel %vm500, 1, 0
      %v631 = vsel %vm501, 1, 0
      %v632 = vsel %vm502, 1, 0
      %v633 = vsel %vm503, 1, 0
      %v634 = vsel %vm504, 1, 0
      %v635 = vsel %vm505, 1, 0
      %v636 = vsel %vm506, 1, 0
      %vm637 = vcmp.eq.s32.totalorder %v621, 1
      %vm638 = vcmp.eq.s32.totalorder %v622, 1
      %vm639 = vcmp.eq.s32.totalorder %v623, 1
      %vm640 = vcmp.eq.s32.totalorder %v624, 1
      %vm641 = vcmp.eq.s32.totalorder %v625, 1
      %vm642 = vcmp.eq.s32.totalorder %v626, 1
      %vm643 = vcmp.eq.s32.totalorder %v627, 1
      %vm644 = vcmp.eq.s32.totalorder %v628, 1
      %vm645 = vcmp.eq.s32.totalorder %v629, 1
      %vm646 = vcmp.eq.s32.totalorder %v630, 1
      %vm647 = vcmp.eq.s32.totalorder %v631, 1
      %vm648 = vcmp.eq.s32.totalorder %v632, 1
      %vm649 = vcmp.eq.s32.totalorder %v633, 1
      %vm650 = vcmp.eq.s32.totalorder %v634, 1
      %vm651 = vcmp.eq.s32.totalorder %v635, 1
      %vm652 = vcmp.eq.s32.totalorder %v636, 1
      %v653 = vsel %vm637, 0.0, %v619
      %v654 = vsel %vm638, 0.0, %v618
      %v655 = vsel %vm639, 0.0, %v617
      %v656 = vsel %vm640, 0.0, %v616
      %v657 = vsel %vm641, 0.0, %v615
      %v658 = vsel %vm642, 0.0, %v614
      %v659 = vsel %vm643, 0.0, %v613
      %v660 = vsel %vm644, 0.0, %v612
      %v661 = vsel %vm645, 0.0, %v611
      %v662 = vsel %vm646, 0.0, %v610
      %v663 = vsel %vm647, 0.0, %v609
      %v664 = vsel %vm648, 0.0, %v608
      %v665 = vsel %vm649, 0.0, %v607
      %v666 = vsel %vm650, 0.0, %v606
      %v667 = vsel %vm651, 0.0, %v605
      %v668 = vsel %vm652, 0.0, %v620
      %v669 = vpack.c.bf16 %v573, %v572
      %v670 = vpack.c.bf16 %v251, %v250
      %v671 = vpack.c.bf16 %v654, %v653
      %v672 = vpack.c.bf16 %v575, %v574
      %v673 = vpack.c.bf16 %v253, %v252
      %v674 = vpack.c.bf16 %v656, %v655
      %v675 = vpack.c.bf16 %v577, %v576
      %v676 = vpack.c.bf16 %v255, %v254
      %v677 = vpack.c.bf16 %v658, %v657
      %v678 = vpack.c.bf16 %v579, %v578
      %v679 = vpack.c.bf16 %v257, %v256
      %v680 = vpack.c.bf16 %v660, %v659
      %v681 = vpack.c.bf16 %v581, %v580
      %v682 = vpack.c.bf16 %v259, %v258
      %v683 = vpack.c.bf16 %v662, %v661
      %v684 = vpack.c.bf16 %v583, %v582
      %v685 = vpack.c.bf16 %v261, %v260
      %v686 = vpack.c.bf16 %v664, %v663
      %v687 = vpack.c.bf16 %v585, %v584
      %v688 = vpack.c.bf16 %v263, %v262
      %v689 = vpack.c.bf16 %v666, %v665
      %v690 = vpack.c.bf16 %v587, %v586
      %v691 = vpack.c.bf16 %v265, %v264
      %v692 = vpack.c.bf16 %v668, %v667
      %v693 = vld [vmem:[%s2] sm:$0xf]
      %v694 = vld [vmem:[%s2 + $0x4] sm:$0xf]
      %v695 = vld [vmem:[%s2 + $0x8] sm:$0xf]
      %v696 = vld [vmem:[%s2 + $0xc] sm:$0xf]
      %v697 = vld [vmem:[%s2 + $0x10] sm:$0xf]
      %v698 = vld [vmem:[%s2 + $0x14] sm:$0xf]
      %v699 = vld [vmem:[%s2 + $0x18] sm:$0xf]
      %v700 = vld [vmem:[%s2 + $0x1c] sm:$0xf]
      %v701 = vld [vmem:[%s2 + $0x20] sm:$0xf]
      %v702 = vld [vmem:[%s2 + $0x24] sm:$0xf]
      %v703 = vld [vmem:[%s2 + $0x28] sm:$0xf]
      %v704 = vld [vmem:[%s2 + $0x2c] sm:$0xf]
      %v705 = vld [vmem:[%s2 + $0x30] sm:$0xf]
      %v706 = vld [vmem:[%s2 + $0x34] sm:$0xf]
      %v707 = vld [vmem:[%s2 + $0x38] sm:$0xf]
      %v708 = vld [vmem:[%s2 + $0x3c] sm:$0xf]
      %v709 = vld [vmem:[%s2 + $0x40] sm:$0xf]
      %v710 = vld [vmem:[%s2 + $0x44] sm:$0xf]
      %v711 = vld [vmem:[%s2 + $0x48] sm:$0xf]
      %v712 = vld [vmem:[%s2 + $0x4c] sm:$0xf]
      %v713 = vld [vmem:[%s2 + $0x50] sm:$0xf]
      %v714 = vld [vmem:[%s2 + $0x54] sm:$0xf]
      %v715 = vld [vmem:[%s2 + $0x58] sm:$0xf]
      %v716 = vld [vmem:[%s2 + $0x5c] sm:$0xf]
      %v717 = vld [vmem:[%s2 + $0x60] sm:$0xf]
      %v718 = vld [vmem:[%s2 + $0x64] sm:$0xf]
      %v719 = vld [vmem:[%s2 + $0x68] sm:$0xf]
      %v720 = vld [vmem:[%s2 + $0x6c] sm:$0xf]
      %v721 = vld [vmem:[%s2 + $0x70] sm:$0xf]
      %v722 = vld [vmem:[%s2 + $0x74] sm:$0xf]
      %v723 = vld [vmem:[%s2 + $0x78] sm:$0xf]
      %v724 = vld [vmem:[%s2 + $0x7c] sm:$0xf]
      %v725 = vld [vmem:[%s2 + $0x80] sm:$0xf]
      %v726 = vld [vmem:[%s2 + $0x84] sm:$0xf]
      %v727 = vld [vmem:[%s2 + $0x88] sm:$0xf]
      %v728 = vld [vmem:[%s2 + $0x8c] sm:$0xf]
      %v729 = vld [vmem:[%s2 + $0x90] sm:$0xf]
      %v730 = vld [vmem:[%s2 + $0x94] sm:$0xf]
      %v731 = vld [vmem:[%s2 + $0x98] sm:$0xf]
      %v732 = vld [vmem:[%s2 + $0x9c] sm:$0xf]
      %v733 = vld [vmem:[%s2 + $0xa0] sm:$0xf]
      %v734 = vld [vmem:[%s2 + $0xa4] sm:$0xf]
      %v735 = vld [vmem:[%s2 + $0xa8] sm:$0xf]
      %v736 = vld [vmem:[%s2 + $0xac] sm:$0xf]
      %v737 = vld [vmem:[%s2 + $0xb0] sm:$0xf]
      %v738 = vld [vmem:[%s2 + $0xb4] sm:$0xf]
      %v739 = vld [vmem:[%s2 + $0xb8] sm:$0xf]
      %v740 = vld [vmem:[%s2 + $0xbc] sm:$0xf]
      %v741 = vld [vmem:[%s4] sm:$0x1]
      %v742 = vperm.slane %v741, 0
      %v791 = vunpack.c.l.b16 %v693
      %v792 = vunpack.c.l.b16 %v694
      %v793 = vunpack.c.l.b16 %v695
      %v794 = vunpack.c.l.b16 %v696
      %v795 = vunpack.c.l.b16 %v697
      %v796 = vunpack.c.l.b16 %v698
      %v797 = vunpack.c.l.b16 %v699
      %v798 = vunpack.c.l.b16 %v700
      %v799 = vunpack.c.l.b16 %v701
      %v800 = vunpack.c.l.b16 %v702
      %v801 = vunpack.c.l.b16 %v703
      %v802 = vunpack.c.l.b16 %v704
      %v803 = vunpack.c.l.b16 %v705
      %v804 = vunpack.c.l.b16 %v706
      %v805 = vunpack.c.l.b16 %v707
      %v806 = vunpack.c.l.b16 %v708
      %v807 = vunpack.c.l.b16 %v709
      %v808 = vunpack.c.l.b16 %v710
      %v809 = vunpack.c.l.b16 %v711
      %v810 = vunpack.c.l.b16 %v712
      %v811 = vunpack.c.l.b16 %v713
      %v812 = vunpack.c.l.b16 %v714
      %v813 = vunpack.c.l.b16 %v715
      %v814 = vunpack.c.l.b16 %v716
      %v815 = vunpack.c.l.b16 %v717
      %v816 = vunpack.c.l.b16 %v718
      %v817 = vunpack.c.l.b16 %v719
      %v818 = vunpack.c.l.b16 %v720
      %v819 = vunpack.c.l.b16 %v721
      %v820 = vunpack.c.l.b16 %v722
      %v821 = vunpack.c.l.b16 %v723
      %v822 = vunpack.c.l.b16 %v724
      %v823 = vunpack.c.l.b16 %v725
      %v824 = vunpack.c.l.b16 %v726
      %v825 = vunpack.c.l.b16 %v727
      %v826 = vunpack.c.l.b16 %v728
      %v827 = vunpack.c.l.b16 %v729
      %v828 = vunpack.c.l.b16 %v730
      %v829 = vunpack.c.l.b16 %v731
      %v830 = vunpack.c.l.b16 %v732
      %v831 = vunpack.c.l.b16 %v733
      %v832 = vunpack.c.l.b16 %v734
      %v833 = vunpack.c.l.b16 %v735
      %v834 = vunpack.c.l.b16 %v736
      %v835 = vunpack.c.l.b16 %v737
      %v836 = vunpack.c.l.b16 %v738
      %v837 = vunpack.c.l.b16 %v739
      %v838 = vunpack.c.l.b16 %v740
      %v839 = vpack.c.b16 %v792, %v791
      %v840 = vpack.c.b16 %v794, %v793
      %v841 = vpack.c.b16 %v796, %v795
      %v842 = vpack.c.b16 %v798, %v797
      %v843 = vpack.c.b16 %v800, %v799
      %v844 = vpack.c.b16 %v802, %v801
      %v845 = vpack.c.b16 %v804, %v803
      %v846 = vpack.c.b16 %v806, %v805
      %v847 = vpack.c.b16 %v808, %v807
      %v848 = vpack.c.b16 %v810, %v809
      %v849 = vpack.c.b16 %v812, %v811
      %v850 = vpack.c.b16 %v814, %v813
      %v851 = vpack.c.b16 %v816, %v815
      %v852 = vpack.c.b16 %v818, %v817
      %v853 = vpack.c.b16 %v820, %v819
      %v854 = vpack.c.b16 %v822, %v821
      %v855 = vpack.c.b16 %v824, %v823
      %v856 = vpack.c.b16 %v826, %v825
      %v857 = vpack.c.b16 %v828, %v827
      %v858 = vpack.c.b16 %v830, %v829
      %v859 = vpack.c.b16 %v832, %v831
      %v860 = vpack.c.b16 %v834, %v833
      %v861 = vpack.c.b16 %v836, %v835
      %v862 = vpack.c.b16 %v838, %v837
      %887 = vmatpush.bf16.msra.mxu0 %v846
      %888 = vmatpush.bf16.msra.mxu0 %v845
      %889 = vmatpush.bf16.msra.mxu0 %v844
      %890 = vmatpush.bf16.msra.mxu0 %v843
      %891 = vmatpush.bf16.msra.mxu0 %v842
      %892 = vmatpush.bf16.msra.mxu0 %v841
      %893 = vmatpush.bf16.msra.mxu0 %v840
      %894 = vmatpush.bf16.msra.mxu0 %v839
      %895 = vmatmul.bf16.gmra.mxu0 %v669
      %v896 = vpop.f32.mrf.mxu0
      %v897 = vadd.f32 %v742, %v896
      %v898 = vpop.f32.mrf.mxu0
      %v899 = vadd.f32 %v742, %v898
      %900 = vmatmul.bf16.gmra.mxu0 %v672
      %v901 = vpop.f32.mrf.mxu0
      %v902 = vadd.f32 %v742, %v901
      %v903 = vpop.f32.mrf.mxu0
      %v904 = vadd.f32 %v742, %v903
      %905 = vmatmul.bf16.gmra.mxu0 %v675
      %v906 = vpop.f32.mrf.mxu0
      %v907 = vadd.f32 %v742, %v906
      %v908 = vpop.f32.mrf.mxu0
      %v909 = vadd.f32 %v742, %v908
      %910 = vmatmul.bf16.gmra.mxu0 %v678
      %v911 = vpop.f32.mrf.mxu0
      %v912 = vadd.f32 %v742, %v911
      %v913 = vpop.f32.mrf.mxu0
      %v914 = vadd.f32 %v742, %v913
      %915 = vmatmul.bf16.gmra.mxu0 %v681
      %v916 = vpop.f32.mrf.mxu0
      %v917 = vadd.f32 %v742, %v916
      %v918 = vpop.f32.mrf.mxu0
      %v919 = vadd.f32 %v742, %v918
      %920 = vmatmul.bf16.gmra.mxu0 %v684
      %v921 = vpop.f32.mrf.mxu0
      %v922 = vadd.f32 %v742, %v921
      %v923 = vpop.f32.mrf.mxu0
      %v924 = vadd.f32 %v742, %v923
      %925 = vmatmul.bf16.gmra.mxu0 %v687
      %v926 = vpop.f32.mrf.mxu0
      %v927 = vadd.f32 %v742, %v926
      %v928 = vpop.f32.mrf.mxu0
      %v929 = vadd.f32 %v742, %v928
      %930 = vmatmul.bf16.gmra.mxu0 %v690
      %v931 = vpop.f32.mrf.mxu0
      %v932 = vadd.f32 %v742, %v931
      %v933 = vpop.f32.mrf.mxu0
      %v934 = vadd.f32 %v742, %v933
      %935 = vdwg.mxu0
      %936 = vmatpush.bf16.msra.mxu0 %v854
      %937 = vmatpush.bf16.msra.mxu0 %v853
      %938 = vmatpush.bf16.msra.mxu0 %v852
      %939 = vmatpush.bf16.msra.mxu0 %v851
      %940 = vmatpush.bf16.msra.mxu0 %v850
      %941 = vmatpush.bf16.msra.mxu0 %v849
      %942 = vmatpush.bf16.msra.mxu0 %v848
      %943 = vmatpush.bf16.msra.mxu0 %v847
      %944 = vmatmul.bf16.gmra.mxu0 %v670
      %v945 = vpop.f32.mrf.mxu0
      %v946 = vadd.f32 %v897, %v945
      %v947 = vpop.f32.mrf.mxu0
      %v948 = vadd.f32 %v899, %v947
      %949 = vmatmul.bf16.gmra.mxu0 %v673
      %v950 = vpop.f32.mrf.mxu0
      %v951 = vadd.f32 %v902, %v950
      %v952 = vpop.f32.mrf.mxu0
      %v953 = vadd.f32 %v904, %v952
      %954 = vmatmul.bf16.gmra.mxu0 %v676
      %v955 = vpop.f32.mrf.mxu0
      %v956 = vadd.f32 %v907, %v955
      %v957 = vpop.f32.mrf.mxu0
      %v958 = vadd.f32 %v909, %v957
      %959 = vmatmul.bf16.gmra.mxu0 %v679
      %v960 = vpop.f32.mrf.mxu0
      %v961 = vadd.f32 %v912, %v960
      %v962 = vpop.f32.mrf.mxu0
      %v963 = vadd.f32 %v914, %v962
      %964 = vmatmul.bf16.gmra.mxu0 %v682
      %v965 = vpop.f32.mrf.mxu0
      %v966 = vadd.f32 %v917, %v965
      %v967 = vpop.f32.mrf.mxu0
      %v968 = vadd.f32 %v919, %v967
      %969 = vmatmul.bf16.gmra.mxu0 %v685
      %v970 = vpop.f32.mrf.mxu0
      %v971 = vadd.f32 %v922, %v970
      %v972 = vpop.f32.mrf.mxu0
      %v973 = vadd.f32 %v924, %v972
      %974 = vmatmul.bf16.gmra.mxu0 %v688
      %v975 = vpop.f32.mrf.mxu0
      %v976 = vadd.f32 %v927, %v975
      %v977 = vpop.f32.mrf.mxu0
      %v978 = vadd.f32 %v929, %v977
      %979 = vmatmul.bf16.gmra.mxu0 %v691
      %v980 = vpop.f32.mrf.mxu0
      %v981 = vadd.f32 %v932, %v980
      %v982 = vpop.f32.mrf.mxu0
      %v983 = vadd.f32 %v934, %v982
      %984 = vdwg.mxu0
      %985 = vmatpush.bf16.msra.mxu0 %v862
      %986 = vmatpush.bf16.msra.mxu0 %v861
      %987 = vmatpush.bf16.msra.mxu0 %v860
      %988 = vmatpush.bf16.msra.mxu0 %v859
      %989 = vmatpush.bf16.msra.mxu0 %v858
      %990 = vmatpush.bf16.msra.mxu0 %v857
      %991 = vmatpush.bf16.msra.mxu0 %v856
      %992 = vmatpush.bf16.msra.mxu0 %v855
      %993 = vmatmul.bf16.gmra.mxu0 %v671
      %v994 = vpop.f32.mrf.mxu0
      %v995 = vadd.f32 %v946, %v994
      %v996 = vpop.f32.mrf.mxu0
      %v997 = vadd.f32 %v948, %v996
      %998 = vmatmul.bf16.gmra.mxu0 %v674
      %v999 = vpop.f32.mrf.mxu0
      %v1000 = vadd.f32 %v951, %v999
      %v1001 = vpop.f32.mrf.mxu0
      %v1002 = vadd.f32 %v953, %v1001
      %1003 = vmatmul.bf16.gmra.mxu0 %v677
      %v1004 = vpop.f32.mrf.mxu0
      %v1005 = vadd.f32 %v956, %v1004
      %v1006 = vpop.f32.mrf.mxu0
      %v1007 = vadd.f32 %v958, %v1006
      %1008 = vmatmul.bf16.gmra.mxu0 %v680
      %v1009 = vpop.f32.mrf.mxu0
      %v1010 = vadd.f32 %v961, %v1009
      %v1011 = vpop.f32.mrf.mxu0
      %v1012 = vadd.f32 %v963, %v1011
      %1013 = vmatmul.bf16.gmra.mxu0 %v683
      %v1014 = vpop.f32.mrf.mxu0
      %v1015 = vadd.f32 %v966, %v1014
      %v1016 = vpop.f32.mrf.mxu0
      %v1017 = vadd.f32 %v968, %v1016
      %1018 = vmatmul.bf16.gmra.mxu0 %v686
      %v1019 = vpop.f32.mrf.mxu0
      %v1020 = vadd.f32 %v971, %v1019
      %v1021 = vpop.f32.mrf.mxu0
      %v1022 = vadd.f32 %v973, %v1021
      %1023 = vmatmul.bf16.gmra.mxu0 %v689
      %v1024 = vpop.f32.mrf.mxu0
      %v1025 = vadd.f32 %v976, %v1024
      %v1026 = vpop.f32.mrf.mxu0
      %v1027 = vadd.f32 %v978, %v1026
      %1028 = vmatmul.bf16.gmra.mxu0 %v692
      %v1029 = vpop.f32.mrf.mxu0
      %v1030 = vadd.f32 %v981, %v1029
      %v1031 = vpop.f32.mrf.mxu0
      %v1032 = vadd.f32 %v983, %v1031
      %1033 = vdwg.mxu0
      %v1034 = vmax.f32 %v995, 0.0
      %v1035 = vmax.f32 %v997, 0.0
      %v1036 = vmax.f32 %v1000, 0.0
      %v1037 = vmax.f32 %v1002, 0.0
      %v1038 = vmax.f32 %v1005, 0.0
      %v1039 = vmax.f32 %v1007, 0.0
      %v1040 = vmax.f32 %v1010, 0.0
      %v1041 = vmax.f32 %v1012, 0.0
      %v1042 = vmax.f32 %v1015, 0.0
      %v1043 = vmax.f32 %v1017, 0.0
      %v1044 = vmax.f32 %v1020, 0.0
      %v1045 = vmax.f32 %v1022, 0.0
      %v1046 = vmax.f32 %v1025, 0.0
      %v1047 = vmax.f32 %v1027, 0.0
      %v1048 = vmax.f32 %v1030, 0.0
      %v1049 = vmax.f32 %v1032, 0.0
      %v1050 = vrot.slane %v1034, 7
      %v1051 = vrot.slane %v1035, 7
      %v1052 = vrot.slane %v1036, 7
      %v1053 = vrot.slane %v1037, 7
      %v1054 = vrot.slane %v1038, 7
      %v1055 = vrot.slane %v1039, 7
      %v1056 = vrot.slane %v1040, 7
      %v1057 = vrot.slane %v1041, 7
      %v1058 = vrot.slane %v1042, 7
      %v1059 = vrot.slane %v1043, 7
      %v1060 = vrot.slane %v1044, 7
      %v1061 = vrot.slane %v1045, 7
      %v1062 = vrot.slane %v1046, 7
      %v1063 = vrot.slane %v1047, 7
      %v1064 = vrot.slane %v1048, 7
      %v1065 = vrot.slane %v1049, 7
      %v1066 = vsel %vm523, %v1064, %v1065
      %v1067 = vsel %vm523, %v1063, %v1064
      %v1068 = vsel %vm523, %v1062, %v1063
      %v1069 = vsel %vm523, %v1061, %v1062
      %v1070 = vsel %vm523, %v1060, %v1061
      %v1071 = vsel %vm523, %v1059, %v1060
      %v1072 = vsel %vm523, %v1058, %v1059
      %v1073 = vsel %vm523, %v1057, %v1058
      %v1074 = vsel %vm523, %v1056, %v1057
      %v1075 = vsel %vm523, %v1055, %v1056
      %v1076 = vsel %vm523, %v1054, %v1055
      %v1077 = vsel %vm523, %v1053, %v1054
      %v1078 = vsel %vm523, %v1052, %v1053
      %v1079 = vsel %vm523, %v1051, %v1052
      %v1080 = vsel %vm523, %v1050, %v1051
      %v1081 = vsel %vm523, %v1065, %v1050
      %v1082 = vsel %vm556, 0.0, %v1081
      %v1083 = vsel %vm557, 0.0, %v1080
      %v1084 = vsel %vm558, 0.0, %v1079
      %v1085 = vsel %vm559, 0.0, %v1078
      %v1086 = vsel %vm560, 0.0, %v1077
      %v1087 = vsel %vm561, 0.0, %v1076
      %v1088 = vsel %vm562, 0.0, %v1075
      %v1089 = vsel %vm563, 0.0, %v1074
      %v1090 = vsel %vm564, 0.0, %v1073
      %v1091 = vsel %vm565, 0.0, %v1072
      %v1092 = vsel %vm566, 0.0, %v1071
      %v1093 = vsel %vm567, 0.0, %v1070
      %v1094 = vsel %vm568, 0.0, %v1069
      %v1095 = vsel %vm569, 0.0, %v1068
      %v1096 = vsel %vm570, 0.0, %v1067
      %v1097 = vsel %vm571, 0.0, %v1066
      %v1098 = vrot.slane %v1034, 1
      %v1099 = vrot.slane %v1035, 1
      %v1100 = vrot.slane %v1036, 1
      %v1101 = vrot.slane %v1037, 1
      %v1102 = vrot.slane %v1038, 1
      %v1103 = vrot.slane %v1039, 1
      %v1104 = vrot.slane %v1040, 1
      %v1105 = vrot.slane %v1041, 1
      %v1106 = vrot.slane %v1042, 1
      %v1107 = vrot.slane %v1043, 1
      %v1108 = vrot.slane %v1044, 1
      %v1109 = vrot.slane %v1045, 1
      %v1110 = vrot.slane %v1046, 1
      %v1111 = vrot.slane %v1047, 1
      %v1112 = vrot.slane %v1048, 1
      %v1113 = vrot.slane %v1049, 1
      %v1114 = vsel %vm604, %v1112, %v1113
      %v1115 = vsel %vm604, %v1111, %v1112
      %v1116 = vsel %vm604, %v1110, %v1111
      %v1117 = vsel %vm604, %v1109, %v1110
      %v1118 = vsel %vm604, %v1108, %v1109
      %v1119 = vsel %vm604, %v1107, %v1108
      %v1120 = vsel %vm604, %v1106, %v1107
      %v1121 = vsel %vm604, %v1105, %v1106
      %v1122 = vsel %vm604, %v1104, %v1105
      %v1123 = vsel %vm604, %v1103, %v1104
      %v1124 = vsel %vm604, %v1102, %v1103
      %v1125 = vsel %vm604, %v1101, %v1102
      %v1126 = vsel %vm604, %v1100, %v1101
      %v1127 = vsel %vm604, %v1099, %v1100
      %v1128 = vsel %vm604, %v1098, %v1099
      %v1129 = vsel %vm604, %v1113, %v1098
      %v1130 = vsel %vm637, 0.0, %v1128
      %v1131 = vsel %vm638, 0.0, %v1127
      %v1132 = vsel %vm639, 0.0, %v1126
      %v1133 = vsel %vm640, 0.0, %v1125
      %v1134 = vsel %vm641, 0.0, %v1124
      %v1135 = vsel %vm642, 0.0, %v1123
      %v1136 = vsel %vm643, 0.0, %v1122
      %v1137 = vsel %vm644, 0.0, %v1121
      %v1138 = vsel %vm645, 0.0, %v1120
      %v1139 = vsel %vm646, 0.0, %v1119
      %v1140 = vsel %vm647, 0.0, %v1118
      %v1141 = vsel %vm648, 0.0, %v1117
      %v1142 = vsel %vm649, 0.0, %v1116
      %v1143 = vsel %vm650, 0.0, %v1115
      %v1144 = vsel %vm651, 0.0, %v1114
      %v1145 = vsel %vm652, 0.0, %v1129
      %v1146 = vpack.c.bf16 %v1083, %v1082
      %v1147 = vpack.c.bf16 %v1035, %v1034
      %v1148 = vpack.c.bf16 %v1131, %v1130
      %v1149 = vpack.c.bf16 %v1085, %v1084
      %v1150 = vpack.c.bf16 %v1037, %v1036
      %v1151 = vpack.c.bf16 %v1133, %v1132
      %v1152 = vpack.c.bf16 %v1087, %v1086
      %v1153 = vpack.c.bf16 %v1039, %v1038
      %v1154 = vpack.c.bf16 %v1135, %v1134
      %v1155 = vpack.c.bf16 %v1089, %v1088
      %v1156 = vpack.c.bf16 %v1041, %v1040
      %v1157 = vpack.c.bf16 %v1137, %v1136
      %v1158 = vpack.c.bf16 %v1091, %v1090
      %v1159 = vpack.c.bf16 %v1043, %v1042
      %v1160 = vpack.c.bf16 %v1139, %v1138
      %v1161 = vpack.c.bf16 %v1093, %v1092
      %v1162 = vpack.c.bf16 %v1045, %v1044
      %v1163 = vpack.c.bf16 %v1141, %v1140
      %v1164 = vpack.c.bf16 %v1095, %v1094
      %v1165 = vpack.c.bf16 %v1047, %v1046
      %v1166 = vpack.c.bf16 %v1143, %v1142
      %v1167 = vpack.c.bf16 %v1097, %v1096
      %v1168 = vpack.c.bf16 %v1049, %v1048
      %v1169 = vpack.c.bf16 %v1145, %v1144
      %s1170 = scalar_lea.vmem %s2, 192
      %v1171 = vld [vmem:[%s1170] sm:$0xf]
      %v1172 = vld [vmem:[%s1170 + $0x4] sm:$0xf]
      %v1173 = vld [vmem:[%s1170 + $0x8] sm:$0xf]
      %v1174 = vld [vmem:[%s1170 + $0xc] sm:$0xf]
      %v1175 = vld [vmem:[%s1170 + $0x10] sm:$0xf]
      %v1176 = vld [vmem:[%s1170 + $0x14] sm:$0xf]
      %v1177 = vld [vmem:[%s1170 + $0x18] sm:$0xf]
      %v1178 = vld [vmem:[%s1170 + $0x1c] sm:$0xf]
      %v1179 = vld [vmem:[%s1170 + $0x20] sm:$0xf]
      %v1180 = vld [vmem:[%s1170 + $0x24] sm:$0xf]
      %v1181 = vld [vmem:[%s1170 + $0x28] sm:$0xf]
      %v1182 = vld [vmem:[%s1170 + $0x2c] sm:$0xf]
      %v1183 = vld [vmem:[%s1170 + $0x30] sm:$0xf]
      %v1184 = vld [vmem:[%s1170 + $0x34] sm:$0xf]
      %v1185 = vld [vmem:[%s1170 + $0x38] sm:$0xf]
      %v1186 = vld [vmem:[%s1170 + $0x3c] sm:$0xf]
      %v1187 = vld [vmem:[%s1170 + $0x40] sm:$0xf]
      %v1188 = vld [vmem:[%s1170 + $0x44] sm:$0xf]
      %v1189 = vld [vmem:[%s1170 + $0x48] sm:$0xf]
      %v1190 = vld [vmem:[%s1170 + $0x4c] sm:$0xf]
      %v1191 = vld [vmem:[%s1170 + $0x50] sm:$0xf]
      %v1192 = vld [vmem:[%s1170 + $0x54] sm:$0xf]
      %v1193 = vld [vmem:[%s1170 + $0x58] sm:$0xf]
      %v1194 = vld [vmem:[%s1170 + $0x5c] sm:$0xf]
      %v1195 = vld [vmem:[%s1170 + $0x60] sm:$0xf]
      %v1196 = vld [vmem:[%s1170 + $0x64] sm:$0xf]
      %v1197 = vld [vmem:[%s1170 + $0x68] sm:$0xf]
      %v1198 = vld [vmem:[%s1170 + $0x6c] sm:$0xf]
      %v1199 = vld [vmem:[%s1170 + $0x70] sm:$0xf]
      %v1200 = vld [vmem:[%s1170 + $0x74] sm:$0xf]
      %v1201 = vld [vmem:[%s1170 + $0x78] sm:$0xf]
      %v1202 = vld [vmem:[%s1170 + $0x7c] sm:$0xf]
      %v1203 = vld [vmem:[%s1170 + $0x80] sm:$0xf]
      %v1204 = vld [vmem:[%s1170 + $0x84] sm:$0xf]
      %v1205 = vld [vmem:[%s1170 + $0x88] sm:$0xf]
      %v1206 = vld [vmem:[%s1170 + $0x8c] sm:$0xf]
      %v1207 = vld [vmem:[%s1170 + $0x90] sm:$0xf]
      %v1208 = vld [vmem:[%s1170 + $0x94] sm:$0xf]
      %v1209 = vld [vmem:[%s1170 + $0x98] sm:$0xf]
      %v1210 = vld [vmem:[%s1170 + $0x9c] sm:$0xf]
      %v1211 = vld [vmem:[%s1170 + $0xa0] sm:$0xf]
      %v1212 = vld [vmem:[%s1170 + $0xa4] sm:$0xf]
      %v1213 = vld [vmem:[%s1170 + $0xa8] sm:$0xf]
      %v1214 = vld [vmem:[%s1170 + $0xac] sm:$0xf]
      %v1215 = vld [vmem:[%s1170 + $0xb0] sm:$0xf]
      %v1216 = vld [vmem:[%s1170 + $0xb4] sm:$0xf]
      %v1217 = vld [vmem:[%s1170 + $0xb8] sm:$0xf]
      %v1218 = vld [vmem:[%s1170 + $0xbc] sm:$0xf]
      %v1219 = vld [vmem:[%s4 + $0x1] sm:$0x1]
      %v1220 = vperm.slane %v1219, 0
      %v1269 = vunpack.c.l.b16 %v1171
      %v1270 = vunpack.c.l.b16 %v1172
      %v1271 = vunpack.c.l.b16 %v1173
      %v1272 = vunpack.c.l.b16 %v1174
      %v1273 = vunpack.c.l.b16 %v1175
      %v1274 = vunpack.c.l.b16 %v1176
      %v1275 = vunpack.c.l.b16 %v1177
      %v1276 = vunpack.c.l.b16 %v1178
      %v1277 = vunpack.c.l.b16 %v1179
      %v1278 = vunpack.c.l.b16 %v1180
      %v1279 = vunpack.c.l.b16 %v1181
      %v1280 = vunpack.c.l.b16 %v1182
      %v1281 = vunpack.c.l.b16 %v1183
      %v1282 = vunpack.c.l.b16 %v1184
      %v1283 = vunpack.c.l.b16 %v1185
      %v1284 = vunpack.c.l.b16 %v1186
      %v1285 = vunpack.c.l.b16 %v1187
      %v1286 = vunpack.c.l.b16 %v1188
      %v1287 = vunpack.c.l.b16 %v1189
      %v1288 = vunpack.c.l.b16 %v1190
      %v1289 = vunpack.c.l.b16 %v1191
      %v1290 = vunpack.c.l.b16 %v1192
      %v1291 = vunpack.c.l.b16 %v1193
      %v1292 = vunpack.c.l.b16 %v1194
      %v1293 = vunpack.c.l.b16 %v1195
      %v1294 = vunpack.c.l.b16 %v1196
      %v1295 = vunpack.c.l.b16 %v1197
      %v1296 = vunpack.c.l.b16 %v1198
      %v1297 = vunpack.c.l.b16 %v1199
      %v1298 = vunpack.c.l.b16 %v1200
      %v1299 = vunpack.c.l.b16 %v1201
      %v1300 = vunpack.c.l.b16 %v1202
      %v1301 = vunpack.c.l.b16 %v1203
      %v1302 = vunpack.c.l.b16 %v1204
      %v1303 = vunpack.c.l.b16 %v1205
      %v1304 = vunpack.c.l.b16 %v1206
      %v1305 = vunpack.c.l.b16 %v1207
      %v1306 = vunpack.c.l.b16 %v1208
      %v1307 = vunpack.c.l.b16 %v1209
      %v1308 = vunpack.c.l.b16 %v1210
      %v1309 = vunpack.c.l.b16 %v1211
      %v1310 = vunpack.c.l.b16 %v1212
      %v1311 = vunpack.c.l.b16 %v1213
      %v1312 = vunpack.c.l.b16 %v1214
      %v1313 = vunpack.c.l.b16 %v1215
      %v1314 = vunpack.c.l.b16 %v1216
      %v1315 = vunpack.c.l.b16 %v1217
      %v1316 = vunpack.c.l.b16 %v1218
      %v1317 = vpack.c.b16 %v1270, %v1269
      %v1318 = vpack.c.b16 %v1272, %v1271
      %v1319 = vpack.c.b16 %v1274, %v1273
      %v1320 = vpack.c.b16 %v1276, %v1275
      %v1321 = vpack.c.b16 %v1278, %v1277
      %v1322 = vpack.c.b16 %v1280, %v1279
      %v1323 = vpack.c.b16 %v1282, %v1281
      %v1324 = vpack.c.b16 %v1284, %v1283
      %v1325 = vpack.c.b16 %v1286, %v1285
      %v1326 = vpack.c.b16 %v1288, %v1287
      %v1327 = vpack.c.b16 %v1290, %v1289
      %v1328 = vpack.c.b16 %v1292, %v1291
      %v1329 = vpack.c.b16 %v1294, %v1293
      %v1330 = vpack.c.b16 %v1296, %v1295
      %v1331 = vpack.c.b16 %v1298, %v1297
      %v1332 = vpack.c.b16 %v1300, %v1299
      %v1333 = vpack.c.b16 %v1302, %v1301
      %v1334 = vpack.c.b16 %v1304, %v1303
      %v1335 = vpack.c.b16 %v1306, %v1305
      %v1336 = vpack.c.b16 %v1308, %v1307
      %v1337 = vpack.c.b16 %v1310, %v1309
      %v1338 = vpack.c.b16 %v1312, %v1311
      %v1339 = vpack.c.b16 %v1314, %v1313
      %v1340 = vpack.c.b16 %v1316, %v1315
      %1365 = vmatpush.bf16.msra.mxu0 %v1324
      %1366 = vmatpush.bf16.msra.mxu0 %v1323
      %1367 = vmatpush.bf16.msra.mxu0 %v1322
      %1368 = vmatpush.bf16.msra.mxu0 %v1321
      %1369 = vmatpush.bf16.msra.mxu0 %v1320
      %1370 = vmatpush.bf16.msra.mxu0 %v1319
      %1371 = vmatpush.bf16.msra.mxu0 %v1318
      %1372 = vmatpush.bf16.msra.mxu0 %v1317
      %1373 = vmatmul.bf16.gmra.mxu0 %v1146
      %v1374 = vpop.f32.mrf.mxu0
      %v1375 = vadd.f32 %v1220, %v1374
      %v1376 = vpop.f32.mrf.mxu0
      %v1377 = vadd.f32 %v1220, %v1376
      %1378 = vmatmul.bf16.gmra.mxu0 %v1149
      %v1379 = vpop.f32.mrf.mxu0
      %v1380 = vadd.f32 %v1220, %v1379
      %v1381 = vpop.f32.mrf.mxu0
      %v1382 = vadd.f32 %v1220, %v1381
      %1383 = vmatmul.bf16.gmra.mxu0 %v1152
      %v1384 = vpop.f32.mrf.mxu0
      %v1385 = vadd.f32 %v1220, %v1384
      %v1386 = vpop.f32.mrf.mxu0
      %v1387 = vadd.f32 %v1220, %v1386
      %1388 = vmatmul.bf16.gmra.mxu0 %v1155
      %v1389 = vpop.f32.mrf.mxu0
      %v1390 = vadd.f32 %v1220, %v1389
      %v1391 = vpop.f32.mrf.mxu0
      %v1392 = vadd.f32 %v1220, %v1391
      %1393 = vmatmul.bf16.gmra.mxu0 %v1158
      %v1394 = vpop.f32.mrf.mxu0
      %v1395 = vadd.f32 %v1220, %v1394
      %v1396 = vpop.f32.mrf.mxu0
      %v1397 = vadd.f32 %v1220, %v1396
      %1398 = vmatmul.bf16.gmra.mxu0 %v1161
      %v1399 = vpop.f32.mrf.mxu0
      %v1400 = vadd.f32 %v1220, %v1399
      %v1401 = vpop.f32.mrf.mxu0
      %v1402 = vadd.f32 %v1220, %v1401
      %1403 = vmatmul.bf16.gmra.mxu0 %v1164
      %v1404 = vpop.f32.mrf.mxu0
      %v1405 = vadd.f32 %v1220, %v1404
      %v1406 = vpop.f32.mrf.mxu0
      %v1407 = vadd.f32 %v1220, %v1406
      %1408 = vmatmul.bf16.gmra.mxu0 %v1167
      %v1409 = vpop.f32.mrf.mxu0
      %v1410 = vadd.f32 %v1220, %v1409
      %v1411 = vpop.f32.mrf.mxu0
      %v1412 = vadd.f32 %v1220, %v1411
      %1413 = vdwg.mxu0
      %1414 = vmatpush.bf16.msra.mxu0 %v1332
      %1415 = vmatpush.bf16.msra.mxu0 %v1331
      %1416 = vmatpush.bf16.msra.mxu0 %v1330
      %1417 = vmatpush.bf16.msra.mxu0 %v1329
      %1418 = vmatpush.bf16.msra.mxu0 %v1328
      %1419 = vmatpush.bf16.msra.mxu0 %v1327
      %1420 = vmatpush.bf16.msra.mxu0 %v1326
      %1421 = vmatpush.bf16.msra.mxu0 %v1325
      %1422 = vmatmul.bf16.gmra.mxu0 %v1147
      %v1423 = vpop.f32.mrf.mxu0
      %v1424 = vadd.f32 %v1375, %v1423
      %v1425 = vpop.f32.mrf.mxu0
      %v1426 = vadd.f32 %v1377, %v1425
      %1427 = vmatmul.bf16.gmra.mxu0 %v1150
      %v1428 = vpop.f32.mrf.mxu0
      %v1429 = vadd.f32 %v1380, %v1428
      %v1430 = vpop.f32.mrf.mxu0
      %v1431 = vadd.f32 %v1382, %v1430
      %1432 = vmatmul.bf16.gmra.mxu0 %v1153
      %v1433 = vpop.f32.mrf.mxu0
      %v1434 = vadd.f32 %v1385, %v1433
      %v1435 = vpop.f32.mrf.mxu0
      %v1436 = vadd.f32 %v1387, %v1435
      %1437 = vmatmul.bf16.gmra.mxu0 %v1156
      %v1438 = vpop.f32.mrf.mxu0
      %v1439 = vadd.f32 %v1390, %v1438
      %v1440 = vpop.f32.mrf.mxu0
      %v1441 = vadd.f32 %v1392, %v1440
      %1442 = vmatmul.bf16.gmra.mxu0 %v1159
      %v1443 = vpop.f32.mrf.mxu0
      %v1444 = vadd.f32 %v1395, %v1443
      %v1445 = vpop.f32.mrf.mxu0
      %v1446 = vadd.f32 %v1397, %v1445
      %1447 = vmatmul.bf16.gmra.mxu0 %v1162
      %v1448 = vpop.f32.mrf.mxu0
      %v1449 = vadd.f32 %v1400, %v1448
      %v1450 = vpop.f32.mrf.mxu0
      %v1451 = vadd.f32 %v1402, %v1450
      %1452 = vmatmul.bf16.gmra.mxu0 %v1165
      %v1453 = vpop.f32.mrf.mxu0
      %v1454 = vadd.f32 %v1405, %v1453
      %v1455 = vpop.f32.mrf.mxu0
      %v1456 = vadd.f32 %v1407, %v1455
      %1457 = vmatmul.bf16.gmra.mxu0 %v1168
      %v1458 = vpop.f32.mrf.mxu0
      %v1459 = vadd.f32 %v1410, %v1458
      %v1460 = vpop.f32.mrf.mxu0
      %v1461 = vadd.f32 %v1412, %v1460
      %1462 = vdwg.mxu0
      %1463 = vmatpush.bf16.msra.mxu0 %v1340
      %1464 = vmatpush.bf16.msra.mxu0 %v1339
      %1465 = vmatpush.bf16.msra.mxu0 %v1338
      %1466 = vmatpush.bf16.msra.mxu0 %v1337
      %1467 = vmatpush.bf16.msra.mxu0 %v1336
      %1468 = vmatpush.bf16.msra.mxu0 %v1335
      %1469 = vmatpush.bf16.msra.mxu0 %v1334
      %1470 = vmatpush.bf16.msra.mxu0 %v1333
      %1471 = vmatmul.bf16.gmra.mxu0 %v1148
      %v1472 = vpop.f32.mrf.mxu0
      %v1473 = vadd.f32 %v1424, %v1472
      %v1474 = vpop.f32.mrf.mxu0
      %v1475 = vadd.f32 %v1426, %v1474
      %1476 = vmatmul.bf16.gmra.mxu0 %v1151
      %v1477 = vpop.f32.mrf.mxu0
      %v1478 = vadd.f32 %v1429, %v1477
      %v1479 = vpop.f32.mrf.mxu0
      %v1480 = vadd.f32 %v1431, %v1479
      %1481 = vmatmul.bf16.gmra.mxu0 %v1154
      %v1482 = vpop.f32.mrf.mxu0
      %v1483 = vadd.f32 %v1434, %v1482
      %v1484 = vpop.f32.mrf.mxu0
      %v1485 = vadd.f32 %v1436, %v1484
      %1486 = vmatmul.bf16.gmra.mxu0 %v1157
      %v1487 = vpop.f32.mrf.mxu0
      %v1488 = vadd.f32 %v1439, %v1487
      %v1489 = vpop.f32.mrf.mxu0
      %v1490 = vadd.f32 %v1441, %v1489
      %1491 = vmatmul.bf16.gmra.mxu0 %v1160
      %v1492 = vpop.f32.mrf.mxu0
      %v1493 = vadd.f32 %v1444, %v1492
      %v1494 = vpop.f32.mrf.mxu0
      %v1495 = vadd.f32 %v1446, %v1494
      %1496 = vmatmul.bf16.gmra.mxu0 %v1163
      %v1497 = vpop.f32.mrf.mxu0
      %v1498 = vadd.f32 %v1449, %v1497
      %v1499 = vpop.f32.mrf.mxu0
      %v1500 = vadd.f32 %v1451, %v1499
      %1501 = vmatmul.bf16.gmra.mxu0 %v1166
      %v1502 = vpop.f32.mrf.mxu0
      %v1503 = vadd.f32 %v1454, %v1502
      %v1504 = vpop.f32.mrf.mxu0
      %v1505 = vadd.f32 %v1456, %v1504
      %1506 = vmatmul.bf16.gmra.mxu0 %v1169
      %v1507 = vpop.f32.mrf.mxu0
      %v1508 = vadd.f32 %v1459, %v1507
      %v1509 = vpop.f32.mrf.mxu0
      %v1510 = vadd.f32 %v1461, %v1509
      %1511 = vdwg.mxu0
      %v1512 = vadd.f32 %v1473, %v250
      %v1513 = vadd.f32 %v1475, %v251
      %v1514 = vadd.f32 %v1478, %v252
      %v1515 = vadd.f32 %v1480, %v253
      %v1516 = vadd.f32 %v1483, %v254
      %v1517 = vadd.f32 %v1485, %v255
      %v1518 = vadd.f32 %v1488, %v256
      %v1519 = vadd.f32 %v1490, %v257
      %v1520 = vadd.f32 %v1493, %v258
      %v1521 = vadd.f32 %v1495, %v259
      %v1522 = vadd.f32 %v1498, %v260
      %v1523 = vadd.f32 %v1500, %v261
      %v1524 = vadd.f32 %v1503, %v262
      %v1525 = vadd.f32 %v1505, %v263
      %v1526 = vadd.f32 %v1508, %v264
      %v1527 = vadd.f32 %v1510, %v265
      %v1528 = vld [vmem:[%s3] sm:$0xf]
      %v1529 = vld [vmem:[%s3 + $0x4] sm:$0xf]
      %v1530 = vld [vmem:[%s3 + $0x8] sm:$0xf]
      %v1531 = vld [vmem:[%s3 + $0xc] sm:$0xf]
      %v1532 = vld [vmem:[%s3 + $0x10] sm:$0xf]
      %v1533 = vld [vmem:[%s3 + $0x14] sm:$0xf]
      %v1534 = vld [vmem:[%s3 + $0x18] sm:$0xf]
      %v1535 = vld [vmem:[%s3 + $0x1c] sm:$0xf]
      %v1536 = vld [vmem:[%s3 + $0x20] sm:$0xf]
      %v1537 = vld [vmem:[%s3 + $0x24] sm:$0xf]
      %v1538 = vld [vmem:[%s3 + $0x28] sm:$0xf]
      %v1539 = vld [vmem:[%s3 + $0x2c] sm:$0xf]
      %v1540 = vld [vmem:[%s3 + $0x30] sm:$0xf]
      %v1541 = vld [vmem:[%s3 + $0x34] sm:$0xf]
      %v1542 = vld [vmem:[%s3 + $0x38] sm:$0xf]
      %v1543 = vld [vmem:[%s3 + $0x3c] sm:$0xf]
      %v1544 = vpack.c.bf16 %v1513, %v1512
      %v1545 = vpack.c.bf16 %v1515, %v1514
      %v1546 = vpack.c.bf16 %v1517, %v1516
      %v1547 = vpack.c.bf16 %v1519, %v1518
      %v1548 = vpack.c.bf16 %v1521, %v1520
      %v1549 = vpack.c.bf16 %v1523, %v1522
      %v1550 = vpack.c.bf16 %v1525, %v1524
      %v1551 = vpack.c.bf16 %v1527, %v1526
      %v1568 = vunpack.c.l.b16 %v1528
      %v1569 = vunpack.c.l.b16 %v1529
      %v1570 = vunpack.c.l.b16 %v1530
      %v1571 = vunpack.c.l.b16 %v1531
      %v1572 = vunpack.c.l.b16 %v1532
      %v1573 = vunpack.c.l.b16 %v1533
      %v1574 = vunpack.c.l.b16 %v1534
      %v1575 = vunpack.c.l.b16 %v1535
      %v1576 = vunpack.c.l.b16 %v1536
      %v1577 = vunpack.c.l.b16 %v1537
      %v1578 = vunpack.c.l.b16 %v1538
      %v1579 = vunpack.c.l.b16 %v1539
      %v1580 = vunpack.c.l.b16 %v1540
      %v1581 = vunpack.c.l.b16 %v1541
      %v1582 = vunpack.c.l.b16 %v1542
      %v1583 = vunpack.c.l.b16 %v1543
      %v1584 = vpack.c.b16 %v1569, %v1568
      %v1585 = vpack.c.b16 %v1571, %v1570
      %v1586 = vpack.c.b16 %v1573, %v1572
      %v1587 = vpack.c.b16 %v1575, %v1574
      %v1588 = vpack.c.b16 %v1577, %v1576
      %v1589 = vpack.c.b16 %v1579, %v1578
      %v1590 = vpack.c.b16 %v1581, %v1580
      %v1591 = vpack.c.b16 %v1583, %v1582
      %1600 = vmatpush.bf16.msra.mxu0 %v1591
      %1601 = vmatpush.bf16.msra.mxu0 %v1590
      %1602 = vmatpush.bf16.msra.mxu0 %v1589
      %1603 = vmatpush.bf16.msra.mxu0 %v1588
      %1604 = vmatpush.bf16.msra.mxu0 %v1587
      %1605 = vmatpush.bf16.msra.mxu0 %v1586
      %1606 = vmatpush.bf16.msra.mxu0 %v1585
      %1607 = vmatpush.bf16.msra.mxu0 %v1584
      %1608 = vmatmul.bf16.gmra.mxu0 %v1544
      %v1609 = vpop.f32.mrf.mxu0
      %v1610 = vadd.f32 0.0, %v1609
      %v1611 = vpop.f32.mrf.mxu0
      %v1612 = vadd.f32 0.0, %v1611
      %1613 = vmatmul.bf16.gmra.mxu0 %v1545
      %v1614 = vpop.f32.mrf.mxu0
      %v1615 = vadd.f32 0.0, %v1614
      %v1616 = vpop.f32.mrf.mxu0
      %v1617 = vadd.f32 0.0, %v1616
      %1618 = vmatmul.bf16.gmra.mxu0 %v1546
      %v1619 = vpop.f32.mrf.mxu0
      %v1620 = vadd.f32 0.0, %v1619
      %v1621 = vpop.f32.mrf.mxu0
      %v1622 = vadd.f32 0.0, %v1621
      %1623 = vmatmul.bf16.gmra.mxu0 %v1547
      %v1624 = vpop.f32.mrf.mxu0
      %v1625 = vadd.f32 0.0, %v1624
      %v1626 = vpop.f32.mrf.mxu0
      %v1627 = vadd.f32 0.0, %v1626
      %1628 = vmatmul.bf16.gmra.mxu0 %v1548
      %v1629 = vpop.f32.mrf.mxu0
      %v1630 = vadd.f32 0.0, %v1629
      %v1631 = vpop.f32.mrf.mxu0
      %v1632 = vadd.f32 0.0, %v1631
      %1633 = vmatmul.bf16.gmra.mxu0 %v1549
      %v1634 = vpop.f32.mrf.mxu0
      %v1635 = vadd.f32 0.0, %v1634
      %v1636 = vpop.f32.mrf.mxu0
      %v1637 = vadd.f32 0.0, %v1636
      %1638 = vmatmul.bf16.gmra.mxu0 %v1550
      %v1639 = vpop.f32.mrf.mxu0
      %v1640 = vadd.f32 0.0, %v1639
      %v1641 = vpop.f32.mrf.mxu0
      %v1642 = vadd.f32 0.0, %v1641
      %1643 = vmatmul.bf16.gmra.mxu0 %v1551
      %v1644 = vpop.f32.mrf.mxu0
      %v1645 = vadd.f32 0.0, %v1644
      %v1646 = vpop.f32.mrf.mxu0
      %v1647 = vadd.f32 0.0, %v1646
      %1648 = vdwg.mxu0
      %v1649 = vsub.f32 %v1512, %v1610
      %v1650 = vsub.f32 %v1513, %v1612
      %v1651 = vsub.f32 %v1514, %v1615
      %v1652 = vsub.f32 %v1515, %v1617
      %v1653 = vsub.f32 %v1516, %v1620
      %v1654 = vsub.f32 %v1517, %v1622
      %v1655 = vsub.f32 %v1518, %v1625
      %v1656 = vsub.f32 %v1519, %v1627
      %v1657 = vsub.f32 %v1520, %v1630
      %v1658 = vsub.f32 %v1521, %v1632
      %v1659 = vsub.f32 %v1522, %v1635
      %v1660 = vsub.f32 %v1523, %v1637
      %v1661 = vsub.f32 %v1524, %v1640
      %v1662 = vsub.f32 %v1525, %v1642
      %v1663 = vsub.f32 %v1526, %v1645
      %v1664 = vsub.f32 %v1527, %v1647
      %v1665 = vmul.f32 %v1649, %v1649
      %v1666 = vmul.f32 %v1650, %v1650
      %v1667 = vmul.f32 %v1651, %v1651
      %v1668 = vmul.f32 %v1652, %v1652
      %v1669 = vmul.f32 %v1653, %v1653
      %v1670 = vmul.f32 %v1654, %v1654
      %v1671 = vmul.f32 %v1655, %v1655
      %v1672 = vmul.f32 %v1656, %v1656
      %v1673 = vmul.f32 %v1657, %v1657
      %v1674 = vmul.f32 %v1658, %v1658
      %v1675 = vmul.f32 %v1659, %v1659
      %v1676 = vmul.f32 %v1660, %v1660
      %v1677 = vmul.f32 %v1661, %v1661
      %v1678 = vmul.f32 %v1662, %v1662
      %v1679 = vmul.f32 %v1663, %v1663
      %v1680 = vmul.f32 %v1664, %v1664
      %v1681 = vpack.c.bf16 %v1666, %v1665
      %v1682 = vpack.c.bf16 %v1668, %v1667
      %v1683 = vpack.c.bf16 %v1670, %v1669
      %v1684 = vpack.c.bf16 %v1672, %v1671
      %v1685 = vpack.c.bf16 %v1674, %v1673
      %v1686 = vpack.c.bf16 %v1676, %v1675
      %v1687 = vpack.c.bf16 %v1678, %v1677
      %v1688 = vpack.c.bf16 %v1680, %v1679
      %1689 = vmatpush.bf16.msra.mxu0 %v1591
      %1690 = vmatpush.bf16.msra.mxu0 %v1590
      %1691 = vmatpush.bf16.msra.mxu0 %v1589
      %1692 = vmatpush.bf16.msra.mxu0 %v1588
      %1693 = vmatpush.bf16.msra.mxu0 %v1587
      %1694 = vmatpush.bf16.msra.mxu0 %v1586
      %1695 = vmatpush.bf16.msra.mxu0 %v1585
      %1696 = vmatpush.bf16.msra.mxu0 %v1584
      %1697 = vmatmul.bf16.gmra.mxu0 %v1681
      %v1698 = vpop.f32.mrf.mxu0
      %v1699 = vadd.f32 1e-05, %v1698
      %v1700 = vpop.f32.mrf.mxu0
      %v1701 = vadd.f32 1e-05, %v1700
      %1702 = vmatmul.bf16.gmra.mxu0 %v1682
      %v1703 = vpop.f32.mrf.mxu0
      %v1704 = vadd.f32 1e-05, %v1703
      %v1705 = vpop.f32.mrf.mxu0
      %v1706 = vadd.f32 1e-05, %v1705
      %1707 = vmatmul.bf16.gmra.mxu0 %v1683
      %v1708 = vpop.f32.mrf.mxu0
      %v1709 = vadd.f32 1e-05, %v1708
      %v1710 = vpop.f32.mrf.mxu0
      %v1711 = vadd.f32 1e-05, %v1710
      %1712 = vmatmul.bf16.gmra.mxu0 %v1684
      %v1713 = vpop.f32.mrf.mxu0
      %v1714 = vadd.f32 1e-05, %v1713
      %v1715 = vpop.f32.mrf.mxu0
      %v1716 = vadd.f32 1e-05, %v1715
      %1717 = vmatmul.bf16.gmra.mxu0 %v1685
      %v1718 = vpop.f32.mrf.mxu0
      %v1719 = vadd.f32 1e-05, %v1718
      %v1720 = vpop.f32.mrf.mxu0
      %v1721 = vadd.f32 1e-05, %v1720
      %1722 = vmatmul.bf16.gmra.mxu0 %v1686
      %v1723 = vpop.f32.mrf.mxu0
      %v1724 = vadd.f32 1e-05, %v1723
      %v1725 = vpop.f32.mrf.mxu0
      %v1726 = vadd.f32 1e-05, %v1725
      %1727 = vmatmul.bf16.gmra.mxu0 %v1687
      %v1728 = vpop.f32.mrf.mxu0
      %v1729 = vadd.f32 1e-05, %v1728
      %v1730 = vpop.f32.mrf.mxu0
      %v1731 = vadd.f32 1e-05, %v1730
      %1732 = vmatmul.bf16.gmra.mxu0 %v1688
      %v1733 = vpop.f32.mrf.mxu0
      %v1734 = vadd.f32 1e-05, %v1733
      %v1735 = vpop.f32.mrf.mxu0
      %v1736 = vadd.f32 1e-05, %v1735
      %1737 = vdwg.mxu0
      %v1738 = vrsqrt.pop %v1699
      %v1739 = vmul.f32 %v1738, %v1699
      %v1740 = vmul.f32 %v1739, %v1738
      %v1741 = vmul.f32 0.5, %v1740
      %v1742 = vsub.f32 1.5, %v1741
      %v1743 = vmul.f32 %v1738, %v1742
      %vm1744 = vweird.f32 %v1699
      %vm1745 = vweird.f32 %v1738
      %vm1746 = vmor %vm1744, %vm1745
      %v1747 = vsel %vm1746, %v1738, %v1743
      %v1748 = vrsqrt.pop %v1701
      %v1749 = vmul.f32 %v1748, %v1701
      %v1750 = vmul.f32 %v1749, %v1748
      %v1751 = vmul.f32 0.5, %v1750
      %v1752 = vsub.f32 1.5, %v1751
      %v1753 = vmul.f32 %v1748, %v1752
      %vm1754 = vweird.f32 %v1701
      %vm1755 = vweird.f32 %v1748
      %vm1756 = vmor %vm1754, %vm1755
      %v1757 = vsel %vm1756, %v1748, %v1753
      %v1758 = vrsqrt.pop %v1704
      %v1759 = vmul.f32 %v1758, %v1704
      %v1760 = vmul.f32 %v1759, %v1758
      %v1761 = vmul.f32 0.5, %v1760
      %v1762 = vsub.f32 1.5, %v1761
      %v1763 = vmul.f32 %v1758, %v1762
      %vm1764 = vweird.f32 %v1704
      %vm1765 = vweird.f32 %v1758
      %vm1766 = vmor %vm1764, %vm1765
      %v1767 = vsel %vm1766, %v1758, %v1763
      %v1768 = vrsqrt.pop %v1706
      %v1769 = vmul.f32 %v1768, %v1706
      %v1770 = vmul.f32 %v1769, %v1768
      %v1771 = vmul.f32 0.5, %v1770
      %v1772 = vsub.f32 1.5, %v1771
      %v1773 = vmul.f32 %v1768, %v1772
      %vm1774 = vweird.f32 %v1706
      %vm1775 = vweird.f32 %v1768
      %vm1776 = vmor %vm1774, %vm1775
      %v1777 = vsel %vm1776, %v1768, %v1773
      %v1778 = vrsqrt.pop %v1709
      %v1779 = vmul.f32 %v1778, %v1709
      %v1780 = vmul.f32 %v1779, %v1778
      %v1781 = vmul.f32 0.5, %v1780
      %v1782 = vsub.f32 1.5, %v1781
      %v1783 = vmul.f32 %v1778, %v1782
      %vm1784 = vweird.f32 %v1709
      %vm1785 = vweird.f32 %v1778
      %vm1786 = vmor %vm1784, %vm1785
      %v1787 = vsel %vm1786, %v1778, %v1783
      %v1788 = vrsqrt.pop %v1711
      %v1789 = vmul.f32 %v1788, %v1711
      %v1790 = vmul.f32 %v1789, %v1788
      %v1791 = vmul.f32 0.5, %v1790
      %v1792 = vsub.f32 1.5, %v1791
      %v1793 = vmul.f32 %v1788, %v1792
      %vm1794 = vweird.f32 %v1711
      %vm1795 = vweird.f32 %v1788
      %vm1796 = vmor %vm1794, %vm1795
      %v1797 = vsel %vm1796, %v1788, %v1793
      %v1798 = vrsqrt.pop %v1714
      %v1799 = vmul.f32 %v1798, %v1714
      %v1800 = vmul.f32 %v1799, %v1798
      %v1801 = vmul.f32 0.5, %v1800
      %v1802 = vsub.f32 1.5, %v1801
      %v1803 = vmul.f32 %v1798, %v1802
      %vm1804 = vweird.f32 %v1714
      %vm1805 = vweird.f32 %v1798
      %vm1806 = vmor %vm1804, %vm1805
      %v1807 = vsel %vm1806, %v1798, %v1803
      %v1808 = vrsqrt.pop %v1716
      %v1809 = vmul.f32 %v1808, %v1716
      %v1810 = vmul.f32 %v1809, %v1808
      %v1811 = vmul.f32 0.5, %v1810
      %v1812 = vsub.f32 1.5, %v1811
      %v1813 = vmul.f32 %v1808, %v1812
      %vm1814 = vweird.f32 %v1716
      %vm1815 = vweird.f32 %v1808
      %vm1816 = vmor %vm1814, %vm1815
      %v1817 = vsel %vm1816, %v1808, %v1813
      %v1818 = vrsqrt.pop %v1719
      %v1819 = vmul.f32 %v1818, %v1719
      %v1820 = vmul.f32 %v1819, %v1818
      %v1821 = vmul.f32 0.5, %v1820
      %v1822 = vsub.f32 1.5, %v1821
      %v1823 = vmul.f32 %v1818, %v1822
      %vm1824 = vweird.f32 %v1719
      %vm1825 = vweird.f32 %v1818
      %vm1826 = vmor %vm1824, %vm1825
      %v1827 = vsel %vm1826, %v1818, %v1823
      %v1828 = vrsqrt.pop %v1721
      %v1829 = vmul.f32 %v1828, %v1721
      %v1830 = vmul.f32 %v1829, %v1828
      %v1831 = vmul.f32 0.5, %v1830
      %v1832 = vsub.f32 1.5, %v1831
      %v1833 = vmul.f32 %v1828, %v1832
      %vm1834 = vweird.f32 %v1721
      %vm1835 = vweird.f32 %v1828
      %vm1836 = vmor %vm1834, %vm1835
      %v1837 = vsel %vm1836, %v1828, %v1833
      %v1838 = vrsqrt.pop %v1724
      %v1839 = vmul.f32 %v1838, %v1724
      %v1840 = vmul.f32 %v1839, %v1838
      %v1841 = vmul.f32 0.5, %v1840
      %v1842 = vsub.f32 1.5, %v1841
      %v1843 = vmul.f32 %v1838, %v1842
      %vm1844 = vweird.f32 %v1724
      %vm1845 = vweird.f32 %v1838
      %vm1846 = vmor %vm1844, %vm1845
      %v1847 = vsel %vm1846, %v1838, %v1843
      %v1848 = vrsqrt.pop %v1726
      %v1849 = vmul.f32 %v1848, %v1726
      %v1850 = vmul.f32 %v1849, %v1848
      %v1851 = vmul.f32 0.5, %v1850
      %v1852 = vsub.f32 1.5, %v1851
      %v1853 = vmul.f32 %v1848, %v1852
      %vm1854 = vweird.f32 %v1726
      %vm1855 = vweird.f32 %v1848
      %vm1856 = vmor %vm1854, %vm1855
      %v1857 = vsel %vm1856, %v1848, %v1853
      %v1858 = vrsqrt.pop %v1729
      %v1859 = vmul.f32 %v1858, %v1729
      %v1860 = vmul.f32 %v1859, %v1858
      %v1861 = vmul.f32 0.5, %v1860
      %v1862 = vsub.f32 1.5, %v1861
      %v1863 = vmul.f32 %v1858, %v1862
      %vm1864 = vweird.f32 %v1729
      %vm1865 = vweird.f32 %v1858
      %vm1866 = vmor %vm1864, %vm1865
      %v1867 = vsel %vm1866, %v1858, %v1863
      %v1868 = vrsqrt.pop %v1731
      %v1869 = vmul.f32 %v1868, %v1731
      %v1870 = vmul.f32 %v1869, %v1868
      %v1871 = vmul.f32 0.5, %v1870
      %v1872 = vsub.f32 1.5, %v1871
      %v1873 = vmul.f32 %v1868, %v1872
      %vm1874 = vweird.f32 %v1731
      %vm1875 = vweird.f32 %v1868
      %vm1876 = vmor %vm1874, %vm1875
      %v1877 = vsel %vm1876, %v1868, %v1873
      %v1878 = vrsqrt.pop %v1734
      %v1879 = vmul.f32 %v1878, %v1734
      %v1880 = vmul.f32 %v1879, %v1878
      %v1881 = vmul.f32 0.5, %v1880
      %v1882 = vsub.f32 1.5, %v1881
      %v1883 = vmul.f32 %v1878, %v1882
      %vm1884 = vweird.f32 %v1734
      %vm1885 = vweird.f32 %v1878
      %vm1886 = vmor %vm1884, %vm1885
      %v1887 = vsel %vm1886, %v1878, %v1883
      %v1888 = vrsqrt.pop %v1736
      %v1889 = vmul.f32 %v1888, %v1736
      %v1890 = vmul.f32 %v1889, %v1888
      %v1891 = vmul.f32 0.5, %v1890
      %v1892 = vsub.f32 1.5, %v1891
      %v1893 = vmul.f32 %v1888, %v1892
      %vm1894 = vweird.f32 %v1736
      %vm1895 = vweird.f32 %v1888
      %vm1896 = vmor %vm1894, %vm1895
      %v1897 = vsel %vm1896, %v1888, %v1893
      %v1898 = vmul.f32 %v1649, %v1747
      %v1899 = vmul.f32 %v1650, %v1757
      %v1900 = vmul.f32 %v1651, %v1767
      %v1901 = vmul.f32 %v1652, %v1777
      %v1902 = vmul.f32 %v1653, %v1787
      %v1903 = vmul.f32 %v1654, %v1797
      %v1904 = vmul.f32 %v1655, %v1807
      %v1905 = vmul.f32 %v1656, %v1817
      %v1906 = vmul.f32 %v1657, %v1827
      %v1907 = vmul.f32 %v1658, %v1837
      %v1908 = vmul.f32 %v1659, %v1847
      %v1909 = vmul.f32 %v1660, %v1857
      %v1910 = vmul.f32 %v1661, %v1867
      %v1911 = vmul.f32 %v1662, %v1877
      %v1912 = vmul.f32 %v1663, %v1887
      %v1913 = vmul.f32 %v1664, %v1897
      %v1914 = vld [vmem:[%s4 + $0x2] sm:$0x1]
      %v1915 = vperm.slane %v1914, 0
      %v1916 = vmul.f32 %v1898, %v1915
      %v1917 = vmul.f32 %v1899, %v1915
      %v1918 = vmul.f32 %v1900, %v1915
      %v1919 = vmul.f32 %v1901, %v1915
      %v1920 = vmul.f32 %v1902, %v1915
      %v1921 = vmul.f32 %v1903, %v1915
      %v1922 = vmul.f32 %v1904, %v1915
      %v1923 = vmul.f32 %v1905, %v1915
      %v1924 = vmul.f32 %v1906, %v1915
      %v1925 = vmul.f32 %v1907, %v1915
      %v1926 = vmul.f32 %v1908, %v1915
      %v1927 = vmul.f32 %v1909, %v1915
      %v1928 = vmul.f32 %v1910, %v1915
      %v1929 = vmul.f32 %v1911, %v1915
      %v1930 = vmul.f32 %v1912, %v1915
      %v1931 = vmul.f32 %v1913, %v1915
      %v1932 = vld [vmem:[%s4 + $0x3] sm:$0x1]
      %v1933 = vperm.slane %v1932, 0
      %v1934 = vadd.f32 %v1916, %v1933
      %v1935 = vadd.f32 %v1917, %v1933
      %v1936 = vadd.f32 %v1918, %v1933
      %v1937 = vadd.f32 %v1919, %v1933
      %v1938 = vadd.f32 %v1920, %v1933
      %v1939 = vadd.f32 %v1921, %v1933
      %v1940 = vadd.f32 %v1922, %v1933
      %v1941 = vadd.f32 %v1923, %v1933
      %v1942 = vadd.f32 %v1924, %v1933
      %v1943 = vadd.f32 %v1925, %v1933
      %v1944 = vadd.f32 %v1926, %v1933
      %v1945 = vadd.f32 %v1927, %v1933
      %v1946 = vadd.f32 %v1928, %v1933
      %v1947 = vadd.f32 %v1929, %v1933
      %v1948 = vadd.f32 %v1930, %v1933
      %v1949 = vadd.f32 %v1931, %v1933
      %v1950 = vld [vmem:[%s242] sm:$0x1]
      %v1951 = vld [vmem:[%s242 + $0x2] sm:$0x1]
      %v1952 = vperm.slane %v1950, 0
      %v1953 = vperm.slane %v1951, 0
      %v1954 = vmul.f32 %v1952, %v1934
      %v1955 = vmul.f32 %v1952, %v1935
      %v1956 = vmul.f32 %v1952, %v1936
      %v1957 = vmul.f32 %v1952, %v1937
      %v1958 = vmul.f32 %v1952, %v1938
      %v1959 = vmul.f32 %v1952, %v1939
      %v1960 = vmul.f32 %v1952, %v1940
      %v1961 = vmul.f32 %v1952, %v1941
      %v1962 = vmul.f32 %v1953, %v1942
      %v1963 = vmul.f32 %v1953, %v1943
      %v1964 = vmul.f32 %v1953, %v1944
      %v1965 = vmul.f32 %v1953, %v1945
      %v1966 = vmul.f32 %v1953, %v1946
      %v1967 = vmul.f32 %v1953, %v1947
      %v1968 = vmul.f32 %v1953, %v1948
      %v1969 = vmul.f32 %v1953, %v1949
      %v1970 = vld [vmem:[%s242 + $0x1] sm:$0x1]
      %v1971 = vld [vmem:[%s242 + $0x3] sm:$0x1]
      %v1972 = vperm.slane %v1970, 0
      %v1973 = vperm.slane %v1971, 0
      %v1974 = vadd.f32 %v1954, %v1972
      %v1975 = vadd.f32 %v1955, %v1972
      %v1976 = vadd.f32 %v1956, %v1972
      %v1977 = vadd.f32 %v1957, %v1972
      %v1978 = vadd.f32 %v1958, %v1972
      %v1979 = vadd.f32 %v1959, %v1972
      %v1980 = vadd.f32 %v1960, %v1972
      %v1981 = vadd.f32 %v1961, %v1972
      %v1982 = vadd.f32 %v1962, %v1973
      %v1983 = vadd.f32 %v1963, %v1973
      %v1984 = vadd.f32 %v1964, %v1973
      %v1985 = vadd.f32 %v1965, %v1973
      %v1986 = vadd.f32 %v1966, %v1973
      %v1987 = vadd.f32 %v1967, %v1973
      %v1988 = vadd.f32 %v1968, %v1973
      %v1989 = vadd.f32 %v1969, %v1973
      %1990 = vst [vmem:[%s248] sm:$0xff] %v1974
      %1991 = vst [vmem:[%s248 + $0x8] sm:$0xff] %v1975
      %1992 = vst [vmem:[%s248 + $0x10] sm:$0xff] %v1976
      %1993 = vst [vmem:[%s248 + $0x18] sm:$0xff] %v1977
      %1994 = vst [vmem:[%s248 + $0x20] sm:$0xff] %v1978
      %1995 = vst [vmem:[%s248 + $0x28] sm:$0xff] %v1979
      %1996 = vst [vmem:[%s248 + $0x30] sm:$0xff] %v1980
      %1997 = vst [vmem:[%s248 + $0x38] sm:$0xff] %v1981
      %1998 = vst [vmem:[%s248 + $0x40] sm:$0xff] %v1982
      %1999 = vst [vmem:[%s248 + $0x48] sm:$0xff] %v1983
      %2000 = vst [vmem:[%s248 + $0x50] sm:$0xff] %v1984
      %2001 = vst [vmem:[%s248 + $0x58] sm:$0xff] %v1985
      %2002 = vst [vmem:[%s248 + $0x60] sm:$0xff] %v1986
      %2003 = vst [vmem:[%s248 + $0x68] sm:$0xff] %v1987
      %2004 = vst [vmem:[%s248 + $0x70] sm:$0xff] %v1988
      %2005 = vst [vmem:[%s248 + $0x78] sm:$0xff] %v1989
      %s2006 = smul.u32 16, %s16
      %p2007 = scmp.lt.s32.totalorder %s2006, 31
      %s2008 = scalar_select %p2007, %s2006, 31
      %s2009 = smul.addr %s2008, 8
      %s2010 = scalar_lea.vmem %s5, %s2009
      // Predicated region
      $region41: #{position_wise_conv_ff.1} parent=39 // pred_check
        %p2011 = pneg %p149
      $region42: #{position_wise_conv_ff.1} parent=39 // pred_check_branch
        %2013 = sbr.rel (%p2011) target = $region44
      $region43: #{position_wise_conv_ff.1} parent=39 // pred_region
        %s2014 = smul.u32 16, %s16
      $region44: #{position_wise_conv_ff.1} parent=39 // pred_fallthru
        _
    $region40: #{position_wise_conv_ff.1} parent=5 // pred_fallthru
      _
    %p2015 = scmp.le.s32.totalorder 2, %s11
    // Predicated region
    $region45: #{position_wise_conv_ff.1} parent=5 // pred_check
      %p2016 = pneg %p2015
    $region46: #{position_wise_conv_ff.1} parent=5 // pred_check_branch
      %2018 = sbr.rel (%p2016) target = $region48
    $region47: #{position_wise_conv_ff.1} parent=5 // pred_region
      %s2019 = ssub.s32 %s11, 2
      // Predicated region
      $region49: #{position_wise_conv_ff.1} parent=47 // pred_check
        %p2020 = pneg %p155
      $region50: #{position_wise_conv_ff.1} parent=47 // pred_check_branch
        %2022 = sbr.rel (%p2020) target = $region52
      $region51: #{position_wise_conv_ff.1} parent=47 // pred_region
        %s2023 = smul.u32 16, %s17
        %p2024 = scmp.lt.s32.totalorder %s2023, 31
        %s2025 = scalar_select %p2024, %s2023, 31
        %s2026 = smul.addr %s2025, 8
        %s2027 = scalar_lea.vmem %s5, %s2026
      $region52: #{position_wise_conv_ff.1} parent=47 // pred_fallthru
        _
    $region48: #{position_wise_conv_ff.1} parent=5 // pred_fallthru
      _
  $region6: #{position_wise_conv_ff.1} parent=0 // loop_footer
    %s15 = sadd.s32 1, %s11
  $region7: #{position_wise_conv_ff.1} parent=0 // loop_footer_branch
    %10 = sbr.rel target = $region3
  $region8: #{position_wise_conv_ff.1} parent=0 // loop_exit
    _

</llo_original>
